<compile_context>
chip_gen: v7x
topology: tpu7x:2x2x1
jax: 0.10.0
libtpu: 0.0.40
codegen_flags: <defaults>
</compile_context>

<pallas_src>
import jax
import jax.numpy as jnp
from jax.experimental import pallas as pl
from jax.experimental.pallas import tpu as pltpu


_LANES = 128        # vreg lane width: last dims should be multiples of this
_SUBLANES = 8       # vreg sublane height: second-to-last dims multiples of this
_DEFAULT_BLOCK_B = 256   # rows of the activation tile per grid step


def _round_up(n: int, m: int) -> int:
    return ((n + m - 1) // m) * m


def _pad2d(a, rows, cols):
    r, c = a.shape
    if r == rows and c == cols:
        return a
    return jnp.pad(a, ((0, rows - r), (0, cols - c)))


def mlp_kernel(x_ref, w1_ref, b1_ref, w2_ref, b2_ref, w3_ref, b3_ref, o_ref):
    """One batch tile of tanh(tanh(tanh(x@W1+b1)@W2+b2)@W3+b3).

    x/W* are bf16 (MXU-native); accumulation, bias add and tanh run in f32.
    """
    # fc1 + tanh
    h1 = jnp.tanh(
        jnp.dot(x_ref[...], w1_ref[...], preferred_element_type=jnp.float32)
        + b1_ref[...]
    )
    # fc2 + tanh (re-quantize the activation to bf16 for the MXU)
    h2 = jnp.tanh(
        jnp.dot(h1.astype(w2_ref.dtype), w2_ref[...],
                preferred_element_type=jnp.float32)
        + b2_ref[...]
    )
    # fc3 + tanh
    out = jnp.tanh(
        jnp.dot(h2.astype(w3_ref.dtype), w3_ref[...],
                preferred_element_type=jnp.float32)
        + b3_ref[...]
    )
    o_ref[...] = out.astype(o_ref.dtype)


def mlp_forward(x, params, *, block_b=None, compute_dtype=jnp.bfloat16):
    """Fused MLP forward.

    x:      [B, input_size] float32 (already flattened; nn.Flatten glue is JAX).
    params: dict with
        w1 [input_size, 512], b1 [1, 512]
        w2 [512, hidden],     b2 [1, hidden]
        w3 [hidden, out],     b3 [1, out]
      Weights are stored [in_features, out_features] (transposed vs PyTorch)
      so the kernel computes y = x @ W + b directly on the MXU.
    Returns [B, out] in x.dtype.
    """
    # TODO(synk): for the tiny-batch, weight-DMA-bound regime, keep the bf16
    # weights resident in VMEM across calls (cross-call prefetch, P10) instead
    # of re-streaming ~1.3 MiB of weights per invocation.
    B, input_size = x.shape
    w1, b1 = params["w1"], params["b1"]
    w2, b2 = params["w2"], params["b2"]
    w3, b3 = params["w3"], params["b3"]
    fc1_out = w1.shape[1]
    hidden_size = w2.shape[1]
    output_size = w3.shape[1]

    # ---- lane-friendly padded feature sizes --------------------------------
    in_p = _round_up(input_size, _LANES)     # 1024 -> 1024
    h1_p = _round_up(fc1_out, _LANES)        # 512  -> 512
    hid_p = _round_up(hidden_size, _LANES)   # 32   -> 128
    out_p = _round_up(output_size, _LANES)   # 8    -> 128

    # ---- batch tiling (capped tile, cdiv grid, zero-padded ragged tile) ----
    if block_b is None:
        block_b = _DEFAULT_BLOCK_B
    # no point tiling finer than the (sublane-padded) batch itself
    block_b = min(_round_up(block_b, _SUBLANES), _round_up(B, _SUBLANES))
    b_pad = _round_up(B, block_b)
    grid = (b_pad // block_b,)

    # ---- pad + cast operands (zero padding is exact) -----------------------
    x_p = _pad2d(x, b_pad, in_p).astype(compute_dtype)
    w1_p = _pad2d(w1, in_p, h1_p).astype(compute_dtype)
    w2_p = _pad2d(w2, h1_p, hid_p).astype(compute_dtype)
    w3_p = _pad2d(w3, hid_p, out_p).astype(compute_dtype)
    # biases stay f32: they are added to the f32 accumulator
    b1_p = _pad2d(b1, 1, h1_p).astype(jnp.float32)
    b2_p = _pad2d(b2, 1, hid_p).astype(jnp.float32)
    b3_p = _pad2d(b3, 1, out_p).astype(jnp.float32)

    # ---- explicit VMEM budget (double-buffered tiles + f32 intermediates) --
    itemsize = jnp.dtype(compute_dtype).itemsize
    per_step_bytes = (
        2 * block_b * in_p * itemsize                                  # x tile
        + 2 * block_b * out_p * 4                                      # out tile
        + 2 * (in_p * h1_p + h1_p * hid_p + hid_p * out_p) * itemsize  # weights
        + 2 * (h1_p + hid_p + out_p) * 4                               # biases
        + block_b * (h1_p + hid_p + out_p) * 4                         # h1/h2/out f32
    )
    vmem_limit = int(min(max(2 * per_step_bytes, 32 << 20), 100 << 20))

    # ---- cost estimate so XLA schedules around the custom call -------------
    flops = 2 * b_pad * (in_p * h1_p + h1_p * hid_p + hid_p * out_p)
    transcendentals = b_pad * (h1_p + hid_p + out_p)
    bytes_accessed = (
        x_p.size * itemsize
        + (w1_p.size + w2_p.size + w3_p.size) * itemsize
        + (b1_p.size + b2_p.size + b3_p.size) * 4
        + b_pad * out_p * 4
    )

    out_padded = pl.pallas_call(
        mlp_kernel,
        out_shape=jax.ShapeDtypeStruct((b_pad, out_p), jnp.float32),
        grid_spec=pltpu.PrefetchScalarGridSpec(
            num_scalar_prefetch=0,
            grid=grid,
            in_specs=[
                # activations: tiled over the batch axis (pipelined per step)
                pl.BlockSpec((block_b, in_p), lambda i: (i, 0)),
                # weights / biases: grid-invariant whole-array blocks; in bf16
                # they total ~1.3 MiB so double-buffering cost is negligible
                # and Mosaic reuses the resident copy across steps.
                pl.BlockSpec((in_p, h1_p), lambda i: (0, 0)),
                pl.BlockSpec((1, h1_p), lambda i: (0, 0)),
                pl.BlockSpec((h1_p, hid_p), lambda i: (0, 0)),
                pl.BlockSpec((1, hid_p), lambda i: (0, 0)),
                pl.BlockSpec((hid_p, out_p), lambda i: (0, 0)),
                pl.BlockSpec((1, out_p), lambda i: (0, 0)),
            ],
            # lane-dense (multiple-of-128) output block -> unmasked stores
            out_specs=pl.BlockSpec((block_b, out_p), lambda i: (i, 0)),
        ),
        compiler_params=pltpu.CompilerParams(
            dimension_semantics=("parallel",),
            vmem_limit_bytes=vmem_limit,
        ),
        cost_estimate=pl.CostEstimate(
            flops=flops,
            transcendentals=transcendentals,
            bytes_accessed=bytes_accessed,
        ),
    )(x_p, w1_p, b1_p, w2_p, b2_p, w3_p, b3_p)

    # strip batch / lane padding
    return out_padded[:B, :output_size].astype(x.dtype)


def init_params(key, input_size, hidden_size, output_size):
    """Deterministic synthetic init (PyTorch-style uniform(-1/sqrt(fan_in), +))."""
    ks = jax.random.split(key, 6)

    def linear(kw, kb, fan_in, fan_out):
        bound = 1.0 / jnp.sqrt(jnp.float32(fan_in))
        w = jax.random.uniform(kw, (fan_in, fan_out), jnp.float32, -bound, bound)
        b = jax.random.uniform(kb, (1, fan_out), jnp.float32, -bound, bound)
        return w, b

    w1, b1 = linear(ks[0], ks[1], input_size, 512)
    w2, b2 = linear(ks[2], ks[3], 512, hidden_size)
    w3, b3 = linear(ks[4], ks[5], hidden_size, output_size)
    return {"w1": w1, "b1": b1, "w2": w2, "b2": b2, "w3": w3, "b3": b3}


def mlp_reference(x, params):
    h1 = jnp.tanh(x @ params["w1"] + params["b1"])
    h2 = jnp.tanh(h1 @ params["w2"] + params["b2"])
    return jnp.tanh(h2 @ params["w3"] + params["b3"])


if __name__ == "__main__":
    key = jax.random.PRNGKey(0)
    k_x, k_p = jax.random.split(key)

    # Example input consistent with the module: an NCHW-ish tensor that
    # nn.Flatten() collapses to [B, input_size].
    B, C, H, W = 2, 4, 16, 16
    input_size = C * H * W          # 1024
    hidden_size = 32
    output_size = 8

    x_nchw = jax.random.normal(k_x, (B, C, H, W), jnp.float32)
    x = x_nchw.reshape(B, -1)       # nn.Flatten glue, in plain JAX

    params = init_params(k_p, input_size, hidden_size, output_size)

    out = mlp_forward(x, params)
    out = jax.block_until_ready(out)

    ref = mlp_reference(x, params)  # full-f32 reference
    assert out.shape == (B, output_size)
    max_err = float(jnp.max(jnp.abs(out - ref)))
    # bf16 MXU inputs with f32 accumulation: loosen tolerance accordingly
    assert max_err < 2e-2, f"mismatch vs reference: max abs err {max_err}"

    print("KERNEL_OK")
</pallas_src>

<mosaic_0001>
module attributes {stable_mosaic.version = 11 : i64} {
  func.func @mlp_kernel(%arg0: i32, %arg1: memref<8x1024xbf16, #tpu.memory_space<vmem>>, %arg2: memref<1024x512xbf16, #tpu.memory_space<vmem>>, %arg3: memref<1x512xf32, #tpu.memory_space<vmem>>, %arg4: memref<512x128xbf16, #tpu.memory_space<vmem>>, %arg5: memref<1x128xf32, #tpu.memory_space<vmem>>, %arg6: memref<128x128xbf16, #tpu.memory_space<vmem>>, %arg7: memref<1x128xf32, #tpu.memory_space<vmem>>, %arg8: memref<8x128xf32, #tpu.memory_space<vmem>>) attributes {dimension_semantics = [#tpu.dimension_semantics<parallel>], iteration_bounds = array<i64: 1>, scalar_prefetch = 0 : i64, scratch_operands = 0 : i64, tpu.core_type = #tpu.core_type<tc>, window_params = [{transform_indices = @transform_0, window_bounds = array<i64: 8, 1024>}, {pipeline_mode = #tpu.pipeline_mode<synchronous>, transform_indices = @transform_1, window_bounds = array<i64: 1024, 512>}, {pipeline_mode = #tpu.pipeline_mode<synchronous>, transform_indices = @transform_2, window_bounds = array<i64: 1, 512>}, {pipeline_mode = #tpu.pipeline_mode<synchronous>, transform_indices = @transform_3, window_bounds = array<i64: 512, 128>}, {pipeline_mode = #tpu.pipeline_mode<synchronous>, transform_indices = @transform_4, window_bounds = array<i64: 1, 128>}, {pipeline_mode = #tpu.pipeline_mode<synchronous>, transform_indices = @transform_5, window_bounds = array<i64: 128, 128>}, {pipeline_mode = #tpu.pipeline_mode<synchronous>, transform_indices = @transform_6, window_bounds = array<i64: 1, 128>}, {transform_indices = @transform_7, window_bounds = array<i64: 8, 128>}]} {
    %c0 = arith.constant 0 : index
    %c0_0 = arith.constant 0 : index
    %0 = vector.load %arg1[%c0, %c0_0] : memref<8x1024xbf16, #tpu.memory_space<vmem>>, vector<8x1024xbf16>
    %c0_1 = arith.constant 0 : index
    %c0_2 = arith.constant 0 : index
    %1 = vector.load %arg2[%c0_1, %c0_2] : memref<1024x512xbf16, #tpu.memory_space<vmem>>, vector<1024x512xbf16>
    %cst = arith.constant dense<0.000000e+00> : vector<8x512xf32>
    %2 = tpu.matmul %0, %1, %cst {dimension_numbers = #tpu.dot_dimension_numbers<[1], [0], [0], [1], [0, 0, 1, 1], [], []>} : vector<8x1024xbf16>, vector<1024x512xbf16>, vector<8x512xf32> -> vector<8x512xf32>
    %c0_3 = arith.constant 0 : index
    %c0_4 = arith.constant 0 : index
    %3 = vector.load %arg3[%c0_3, %c0_4] : memref<1x512xf32, #tpu.memory_space<vmem>>, vector<1x512xf32>
    %4 = vector.broadcast %3 : vector<1x512xf32> to vector<8x512xf32>
    %5 = arith.addf %2, %4 : vector<8x512xf32>
    %6 = math.tanh %5 : vector<8x512xf32>
    %7 = arith.truncf %6 : vector<8x512xf32> to vector<8x512xbf16>
    %c0_5 = arith.constant 0 : index
    %c0_6 = arith.constant 0 : index
    %8 = vector.load %arg4[%c0_5, %c0_6] : memref<512x128xbf16, #tpu.memory_space<vmem>>, vector<512x128xbf16>
    %cst_7 = arith.constant dense<0.000000e+00> : vector<8x128xf32>
    %9 = tpu.matmul %7, %8, %cst_7 {dimension_numbers = #tpu.dot_dimension_numbers<[1], [0], [0], [1], [0, 0, 1, 1], [], []>} : vector<8x512xbf16>, vector<512x128xbf16>, vector<8x128xf32> -> vector<8x128xf32>
    %c0_8 = arith.constant 0 : index
    %c0_9 = arith.constant 0 : index
    %10 = vector.load %arg5[%c0_8, %c0_9] : memref<1x128xf32, #tpu.memory_space<vmem>>, vector<1x128xf32>
    %11 = vector.broadcast %10 : vector<1x128xf32> to vector<8x128xf32>
    %12 = arith.addf %9, %11 : vector<8x128xf32>
    %13 = math.tanh %12 : vector<8x128xf32>
    %14 = arith.truncf %13 : vector<8x128xf32> to vector<8x128xbf16>
    %c0_10 = arith.constant 0 : index
    %c0_11 = arith.constant 0 : index
    %15 = vector.load %arg6[%c0_10, %c0_11] : memref<128x128xbf16, #tpu.memory_space<vmem>>, vector<128x128xbf16>
    %cst_12 = arith.constant dense<0.000000e+00> : vector<8x128xf32>
    %16 = tpu.matmul %14, %15, %cst_12 {dimension_numbers = #tpu.dot_dimension_numbers<[1], [0], [0], [1], [0, 0, 1, 1], [], []>} : vector<8x128xbf16>, vector<128x128xbf16>, vector<8x128xf32> -> vector<8x128xf32>
    %c0_13 = arith.constant 0 : index
    %c0_14 = arith.constant 0 : index
    %17 = vector.load %arg7[%c0_13, %c0_14] : memref<1x128xf32, #tpu.memory_space<vmem>>, vector<1x128xf32>
    %18 = vector.broadcast %17 : vector<1x128xf32> to vector<8x128xf32>
    %19 = arith.addf %16, %18 : vector<8x128xf32>
    %20 = math.tanh %19 : vector<8x128xf32>
    %c0_15 = arith.constant 0 : index
    %c0_16 = arith.constant 0 : index
    %21 = vector.load %arg8[%c0_15, %c0_16] : memref<8x128xf32, #tpu.memory_space<vmem>>, vector<8x128xf32>
    tpu.vector_store %arg8[%c0_15, %c0_16], %20 {strides = array<i32>} : memref<8x128xf32, #tpu.memory_space<vmem>>, vector<8x128xf32>,
    return
  }
  func.func @transform_0(%arg0: i32) -> (i32, i32) {
    %c0_i32 = arith.constant 0 : i32
    %c0_i32_0 = arith.constant 0 : i32
    return %arg0, %c0_i32 : i32, i32
  }
  func.func @transform_1(%arg0: i32) -> (i32, i32) {
    %c0_i32 = arith.constant 0 : i32
    %c0_i32_0 = arith.constant 0 : i32
    %c0_i32_1 = arith.constant 0 : i32
    return %c0_i32, %c0_i32_0 : i32, i32
  }
  func.func @transform_2(%arg0: i32) -> (i32, i32) {
    %c0_i32 = arith.constant 0 : i32
    %c0_i32_0 = arith.constant 0 : i32
    %c0_i32_1 = arith.constant 0 : i32
    return %c0_i32, %c0_i32_0 : i32, i32
  }
  func.func @transform_3(%arg0: i32) -> (i32, i32) {
    %c0_i32 = arith.constant 0 : i32
    %c0_i32_0 = arith.constant 0 : i32
    %c0_i32_1 = arith.constant 0 : i32
    return %c0_i32, %c0_i32_0 : i32, i32
  }
  func.func @transform_4(%arg0: i32) -> (i32, i32) {
    %c0_i32 = arith.constant 0 : i32
    %c0_i32_0 = arith.constant 0 : i32
    %c0_i32_1 = arith.constant 0 : i32
    return %c0_i32, %c0_i32_0 : i32, i32
  }
  func.func @transform_5(%arg0: i32) -> (i32, i32) {
    %c0_i32 = arith.constant 0 : i32
    %c0_i32_0 = arith.constant 0 : i32
    %c0_i32_1 = arith.constant 0 : i32
    return %c0_i32, %c0_i32_0 : i32, i32
  }
  func.func @transform_6(%arg0: i32) -> (i32, i32) {
    %c0_i32 = arith.constant 0 : i32
    %c0_i32_0 = arith.constant 0 : i32
    %c0_i32_1 = arith.constant 0 : i32
    return %c0_i32, %c0_i32_0 : i32, i32
  }
  func.func @transform_7(%arg0: i32) -> (i32, i32) {
    %c0_i32 = arith.constant 0 : i32
    %c0_i32_0 = arith.constant 0 : i32
    return %arg0, %c0_i32 : i32, i32
  }
}

</mosaic_0001>

<llo_original>
// kernel: tpu_custom_call.1
$region0: #{tpu_custom_call.1}
  #allocation0 [shape = 'u32[]', space=smem, size = 0x4, offset = 0x4, fixed_abs, tag = 'smem constant byte address 0x4 - core index']
  #allocation1 [shape = 'u32[144,128]{1,0:T(1,128)}', space=vmem, size = 0x12000, scoped, tag = 'internal scratch']
  %s0 = inlined_call_operand.hbm [shape: bf16[8,1024], index: 0, kind: input, shape index: {}]
  %s1 = inlined_call_operand.hbm [shape: bf16[1024,512], index: 1, kind: input, shape index: {}]
  %s2 = inlined_call_operand.vmem [shape: f32[1,512], index: 2, kind: input, shape index: {}]
  %s3 = inlined_call_operand.hbm [shape: bf16[512,128], index: 3, kind: input, shape index: {}]
  %s4 = inlined_call_operand.vmem [shape: f32[1,128], index: 4, kind: input, shape index: {}]
  %s5 = inlined_call_operand.hbm [shape: bf16[128,128], index: 5, kind: input, shape index: {}]
  %s6 = inlined_call_operand.vmem [shape: f32[1,128], index: 6, kind: input, shape index: {}]
  %s7 = inlined_call_operand.hbm [shape: f32[8,128], index: 7, kind: output, shape index: {}]
  %s8 = sld [smem:[#allocation0]]
  $region54: #{tpu_custom_call.1} parent=0
    _
  %s10 = ssub.s32 1, %s8
  %s11 = scalar_select 0, %s10, %s8
  $region1: #{tpu_custom_call.1} parent=0
    #allocation2 [shape = 'u8[16384]{0}', space=vmem, size = 0x4000, scoped, tag = 'input window, operand 0, single buffered']
    #allocation3 [shape = 's32[1]{0}', space=sflag, size = 0x4, scoped, tag = 'scoped memory for tpu_custom_call.1']
    #allocation4 [shape = 's32[1]{0}', space=sflag, size = 0x4, scoped, tag = 'scoped memory for tpu_custom_call.1']
    #allocation5 [shape = 'u8[1048576]{0}', space=vmem, size = 0x100000, scoped, tag = 'input window, operand 1, single buffered']
    #allocation6 [shape = 's32[1]{0}', space=sflag, size = 0x4, scoped, tag = 'scoped memory for tpu_custom_call.1']
    #allocation7 [shape = 'u8[131072]{0}', space=vmem, size = 0x20000, scoped, tag = 'input window, operand 3, single buffered']
    #allocation8 [shape = 'u8[32768]{0}', space=vmem, size = 0x8000, scoped, tag = 'input window, operand 5, single buffered']
    #allocation9 [shape = 's32[1]{0}', space=sflag, size = 0x4, scoped, tag = 'scoped memory for tpu_custom_call.1']
    #allocation10 [shape = 'u8[4096]{0}', space=vmem, size = 0x1000, scoped, tag = 'output window, operand 0, single buffered']
    %12 = vsyncpa [#allocation3], 0
    %13 = vsyncpa [#allocation6], 0
    %14 = vsyncpa [#allocation9], 0
    %15 = vsyncpa [#allocation4], 0
    // Predicated region
    $region2: #{tpu_custom_call.1} parent=1 // pred_check
      _
    $region3: #{tpu_custom_call.1} parent=1 // pred_check_branch
      %17 = sbr.rel (0) target = $region5
    $region4: #{tpu_custom_call.1} parent=1 // pred_region
      %s19 = ssub.s32 512, 512
      %20 = vsyncadd [#allocation3], %s19
      %s22 = sshll.u32 [#allocation2], 4
      %s23 = int_to_ptr.vmem [resolvable:$true] %s22
      %25 = dma.hbm_to_vmem [thread:$0]  %s0, 512, %s23, [#allocation3]
    $region5: #{tpu_custom_call.1} parent=1 // pred_fallthru
      _
    // Predicated region
    $region6: #{tpu_custom_call.1} parent=1 // pred_check
      _
    $region7: #{tpu_custom_call.1} parent=1 // pred_check_branch
      %27 = sbr.rel (0) target = $region9
    $region8: #{tpu_custom_call.1} parent=1 // pred_region
      %s29 = ssub.s32 32768, 32768
      %30 = vsyncadd [#allocation6], %s29
      %s31 = sshll.u32 [#allocation5], 4
      %s32 = int_to_ptr.vmem [resolvable:$true] %s31
      %37 = dma.hbm_to_vmem [thread:$0]  %s1, 32768, %s32, [#allocation6], 256, 256, 16
    $region9: #{tpu_custom_call.1} parent=1 // pred_fallthru
      _
    // Predicated region
    $region10: #{tpu_custom_call.1} parent=1 // pred_check
      _
    $region11: #{tpu_custom_call.1} parent=1 // pred_check_branch
      %39 = sbr.rel (0) target = $region13
    $region12: #{tpu_custom_call.1} parent=1 // pred_region
      _
    $region13: #{tpu_custom_call.1} parent=1 // pred_fallthru
      _
    // Predicated region
    $region14: #{tpu_custom_call.1} parent=1 // pred_check
      _
    $region15: #{tpu_custom_call.1} parent=1 // pred_check_branch
      %41 = sbr.rel (0) target = $region17
    $region16: #{tpu_custom_call.1} parent=1 // pred_region
      %s43 = ssub.s32 4096, 4096
      %44 = vsyncadd [#allocation6], %s43
      %s45 = sshll.u32 [#allocation7], 4
      %s46 = int_to_ptr.vmem [resolvable:$true] %s45
      %51 = dma.hbm_to_vmem [thread:$0]  %s3, 4096, %s46, [#allocation6], 64, 64, 4
    $region17: #{tpu_custom_call.1} parent=1 // pred_fallthru
      _
    // Predicated region
    $region18: #{tpu_custom_call.1} parent=1 // pred_check
      _
    $region19: #{tpu_custom_call.1} parent=1 // pred_check_branch
      %53 = sbr.rel (0) target = $region21
    $region20: #{tpu_custom_call.1} parent=1 // pred_region
      _
    $region21: #{tpu_custom_call.1} parent=1 // pred_fallthru
      _
    // Predicated region
    $region22: #{tpu_custom_call.1} parent=1 // pred_check
      _
    $region23: #{tpu_custom_call.1} parent=1 // pred_check_branch
      %55 = sbr.rel (0) target = $region25
    $region24: #{tpu_custom_call.1} parent=1 // pred_region
      %s57 = ssub.s32 1024, 1024
      %58 = vsyncadd [#allocation9], %s57
      %s59 = sshll.u32 [#allocation8], 4
      %s60 = int_to_ptr.vmem [resolvable:$true] %s59
      %65 = dma.hbm_to_vmem [thread:$0]  %s5, 1024, %s60, [#allocation9], 64, 64, 4
    $region25: #{tpu_custom_call.1} parent=1 // pred_fallthru
      _
    // Predicated region
    $region26: #{tpu_custom_call.1} parent=1 // pred_check
      _
    $region27: #{tpu_custom_call.1} parent=1 // pred_check_branch
      %67 = sbr.rel (0) target = $region29
    $region28: #{tpu_custom_call.1} parent=1 // pred_region
      _
    $region29: #{tpu_custom_call.1} parent=1 // pred_fallthru
      _
    // Predicated region
    $region30: #{tpu_custom_call.1} parent=1 // pred_check
      _
    $region31: #{tpu_custom_call.1} parent=1 // pred_check_branch
      %69 = sbr.rel (0) target = $region33
    $region32: #{tpu_custom_call.1} parent=1 // pred_region
      %70 = dma.done [#allocation3], 512
    $region33: #{tpu_custom_call.1} parent=1 // pred_fallthru
      _
    // Predicated region
    $region34: #{tpu_custom_call.1} parent=1 // pred_check
      _
    $region35: #{tpu_custom_call.1} parent=1 // pred_check_branch
      %72 = sbr.rel (0) target = $region37
    $region36: #{tpu_custom_call.1} parent=1 // pred_region
      %73 = dma.done [#allocation6], 32768
    $region37: #{tpu_custom_call.1} parent=1 // pred_fallthru
      _
    // Predicated region
    $region38: #{tpu_custom_call.1} parent=1 // pred_check
      _
    $region39: #{tpu_custom_call.1} parent=1 // pred_check_branch
      %75 = sbr.rel (0) target = $region41
    $region40: #{tpu_custom_call.1} parent=1 // pred_region
      %76 = dma.done [#allocation6], 4096
    $region41: #{tpu_custom_call.1} parent=1 // pred_fallthru
      _
    // Predicated region
    $region42: #{tpu_custom_call.1} parent=1 // pred_check
      _
    $region43: #{tpu_custom_call.1} parent=1 // pred_check_branch
      %78 = sbr.rel (0) target = $region45
    $region44: #{tpu_custom_call.1} parent=1 // pred_region
      %79 = dma.done [#allocation9], 1024
    $region45: #{tpu_custom_call.1} parent=1 // pred_fallthru
      _
    %v81 = vld [vmem:[#allocation2] sm:$0xff]
    %v82 = vld [vmem:[#allocation2 + $0x8] sm:$0xff]
    %v83 = vld [vmem:[#allocation2 + $0x10] sm:$0xff]
    %v84 = vld [vmem:[#allocation2 + $0x18] sm:$0xff]
    %v85 = vld [vmem:[#allocation5] sm:$0xff]
    %v86 = vld [vmem:[#allocation5 + $0x8] sm:$0xff]
    %v87 = vld [vmem:[#allocation5 + $0x10] sm:$0xff]
    %v88 = vld [vmem:[#allocation5 + $0x18] sm:$0xff]
    %v89 = vld [vmem:[#allocation5 + $0x20] sm:$0xff]
    %v90 = vld [vmem:[#allocation5 + $0x28] sm:$0xff]
    %v91 = vld [vmem:[#allocation5 + $0x30] sm:$0xff]
    %v92 = vld [vmem:[#allocation5 + $0x38] sm:$0xff]
    %v93 = vld [vmem:[#allocation5 + $0x40] sm:$0xff]
    %v94 = vld [vmem:[#allocation5 + $0x48] sm:$0xff]
    %v95 = vld [vmem:[#allocation5 + $0x50] sm:$0xff]
    %v96 = vld [vmem:[#allocation5 + $0x58] sm:$0xff]
    %v97 = vld [vmem:[#allocation5 + $0x60] sm:$0xff]
    %v98 = vld [vmem:[#allocation5 + $0x68] sm:$0xff]
    %v99 = vld [vmem:[#allocation5 + $0x70] sm:$0xff]
    %v100 = vld [vmem:[#allocation5 + $0x78] sm:$0xff]
    %v101 = vld [vmem:[#allocation5 + $0x80] sm:$0xff]
    %v102 = vld [vmem:[#allocation5 + $0x88] sm:$0xff]
    %v103 = vld [vmem:[#allocation5 + $0x90] sm:$0xff]
    %v104 = vld [vmem:[#allocation5 + $0x98] sm:$0xff]
    %v105 = vld [vmem:[#allocation5 + $0xa0] sm:$0xff]
    %v106 = vld [vmem:[#allocation5 + $0xa8] sm:$0xff]
    %v107 = vld [vmem:[#allocation5 + $0xb0] sm:$0xff]
    %v108 = vld [vmem:[#allocation5 + $0xb8] sm:$0xff]
    %v109 = vld [vmem:[#allocation5 + $0xc0] sm:$0xff]
    %v110 = vld [vmem:[#allocation5 + $0xc8] sm:$0xff]
    %v111 = vld [vmem:[#allocation5 + $0xd0] sm:$0xff]
    %v112 = vld [vmem:[#allocation5 + $0xd8] sm:$0xff]
    %v113 = vld [vmem:[#allocation5 + $0xe0] sm:$0xff]
    %v114 = vld [vmem:[#allocation5 + $0xe8] sm:$0xff]
    %v115 = vld [vmem:[#allocation5 + $0xf0] sm:$0xff]
    %v116 = vld [vmem:[#allocation5 + $0xf8] sm:$0xff]
    %v117 = vld [vmem:[#allocation5 + $0x100] sm:$0xff]
    %v118 = vld [vmem:[#allocation5 + $0x108] sm:$0xff]
    %v119 = vld [vmem:[#allocation5 + $0x110] sm:$0xff]
    %v120 = vld [vmem:[#allocation5 + $0x118] sm:$0xff]
    %v121 = vld [vmem:[#allocation5 + $0x120] sm:$0xff]
    %v122 = vld [vmem:[#allocation5 + $0x128] sm:$0xff]
    %v123 = vld [vmem:[#allocation5 + $0x130] sm:$0xff]
    %v124 = vld [vmem:[#allocation5 + $0x138] sm:$0xff]
    %v125 = vld [vmem:[#allocation5 + $0x140] sm:$0xff]
    %v126 = vld [vmem:[#allocation5 + $0x148] sm:$0xff]
    %v127 = vld [vmem:[#allocation5 + $0x150] sm:$0xff]
    %v128 = vld [vmem:[#allocation5 + $0x158] sm:$0xff]
    %v129 = vld [vmem:[#allocation5 + $0x160] sm:$0xff]
    %v130 = vld [vmem:[#allocation5 + $0x168] sm:$0xff]
    %v131 = vld [vmem:[#allocation5 + $0x170] sm:$0xff]
    %v132 = vld [vmem:[#allocation5 + $0x178] sm:$0xff]
    %v133 = vld [vmem:[#allocation5 + $0x180] sm:$0xff]
    %v134 = vld [vmem:[#allocation5 + $0x188] sm:$0xff]
    %v135 = vld [vmem:[#allocation5 + $0x190] sm:$0xff]
    %v136 = vld [vmem:[#allocation5 + $0x198] sm:$0xff]
    %v137 = vld [vmem:[#allocation5 + $0x1a0] sm:$0xff]
    %v138 = vld [vmem:[#allocation5 + $0x1a8] sm:$0xff]
    %v139 = vld [vmem:[#allocation5 + $0x1b0] sm:$0xff]
    %v140 = vld [vmem:[#allocation5 + $0x1b8] sm:$0xff]
    %v141 = vld [vmem:[#allocation5 + $0x1c0] sm:$0xff]
    %v142 = vld [vmem:[#allocation5 + $0x1c8] sm:$0xff]
    %v143 = vld [vmem:[#allocation5 + $0x1d0] sm:$0xff]
    %v144 = vld [vmem:[#allocation5 + $0x1d8] sm:$0xff]
    %v145 = vld [vmem:[#allocation5 + $0x1e0] sm:$0xff]
    %v146 = vld [vmem:[#allocation5 + $0x1e8] sm:$0xff]
    %v147 = vld [vmem:[#allocation5 + $0x1f0] sm:$0xff]
    %v148 = vld [vmem:[#allocation5 + $0x1f8] sm:$0xff]
    %v149 = vld [vmem:[#allocation5 + $0x200] sm:$0xff]
    %v150 = vld [vmem:[#allocation5 + $0x208] sm:$0xff]
    %v151 = vld [vmem:[#allocation5 + $0x210] sm:$0xff]
    %v152 = vld [vmem:[#allocation5 + $0x218] sm:$0xff]
    %v153 = vld [vmem:[#allocation5 + $0x220] sm:$0xff]
    %v154 = vld [vmem:[#allocation5 + $0x228] sm:$0xff]
    %v155 = vld [vmem:[#allocation5 + $0x230] sm:$0xff]
    %v156 = vld [vmem:[#allocation5 + $0x238] sm:$0xff]
    %v157 = vld [vmem:[#allocation5 + $0x240] sm:$0xff]
    %v158 = vld [vmem:[#allocation5 + $0x248] sm:$0xff]
    %v159 = vld [vmem:[#allocation5 + $0x250] sm:$0xff]
    %v160 = vld [vmem:[#allocation5 + $0x258] sm:$0xff]
    %v161 = vld [vmem:[#allocation5 + $0x260] sm:$0xff]
    %v162 = vld [vmem:[#allocation5 + $0x268] sm:$0xff]
    %v163 = vld [vmem:[#allocation5 + $0x270] sm:$0xff]
    %v164 = vld [vmem:[#allocation5 + $0x278] sm:$0xff]
    %v165 = vld [vmem:[#allocation5 + $0x280] sm:$0xff]
    %v166 = vld [vmem:[#allocation5 + $0x288] sm:$0xff]
    %v167 = vld [vmem:[#allocation5 + $0x290] sm:$0xff]
    %v168 = vld [vmem:[#allocation5 + $0x298] sm:$0xff]
    %v169 = vld [vmem:[#allocation5 + $0x2a0] sm:$0xff]
    %v170 = vld [vmem:[#allocation5 + $0x2a8] sm:$0xff]
    %v171 = vld [vmem:[#allocation5 + $0x2b0] sm:$0xff]
    %v172 = vld [vmem:[#allocation5 + $0x2b8] sm:$0xff]
    %v173 = vld [vmem:[#allocation5 + $0x2c0] sm:$0xff]
    %v174 = vld [vmem:[#allocation5 + $0x2c8] sm:$0xff]
    %v175 = vld [vmem:[#allocation5 + $0x2d0] sm:$0xff]
    %v176 = vld [vmem:[#allocation5 + $0x2d8] sm:$0xff]
    %v177 = vld [vmem:[#allocation5 + $0x2e0] sm:$0xff]
    %v178 = vld [vmem:[#allocation5 + $0x2e8] sm:$0xff]
    %v179 = vld [vmem:[#allocation5 + $0x2f0] sm:$0xff]
    %v180 = vld [vmem:[#allocation5 + $0x2f8] sm:$0xff]
    %v181 = vld [vmem:[#allocation5 + $0x300] sm:$0xff]
    %v182 = vld [vmem:[#allocation5 + $0x308] sm:$0xff]
    %v183 = vld [vmem:[#allocation5 + $0x310] sm:$0xff]
    %v184 = vld [vmem:[#allocation5 + $0x318] sm:$0xff]
    %v185 = vld [vmem:[#allocation5 + $0x320] sm:$0xff]
    %v186 = vld [vmem:[#allocation5 + $0x328] sm:$0xff]
    %v187 = vld [vmem:[#allocation5 + $0x330] sm:$0xff]
    %v188 = vld [vmem:[#allocation5 + $0x338] sm:$0xff]
    %v189 = vld [vmem:[#allocation5 + $0x340] sm:$0xff]
    %v190 = vld [vmem:[#allocation5 + $0x348] sm:$0xff]
    %v191 = vld [vmem:[#allocation5 + $0x350] sm:$0xff]
    %v192 = vld [vmem:[#allocation5 + $0x358] sm:$0xff]
    %v193 = vld [vmem:[#allocation5 + $0x360] sm:$0xff]
    %v194 = vld [vmem:[#allocation5 + $0x368] sm:$0xff]
    %v195 = vld [vmem:[#allocation5 + $0x370] sm:$0xff]
    %v196 = vld [vmem:[#allocation5 + $0x378] sm:$0xff]
    %v197 = vld [vmem:[#allocation5 + $0x380] sm:$0xff]
    %v198 = vld [vmem:[#allocation5 + $0x388] sm:$0xff]
    %v199 = vld [vmem:[#allocation5 + $0x390] sm:$0xff]
    %v200 = vld [vmem:[#allocation5 + $0x398] sm:$0xff]
    %v201 = vld [vmem:[#allocation5 + $0x3a0] sm:$0xff]
    %v202 = vld [vmem:[#allocation5 + $0x3a8] sm:$0xff]
    %v203 = vld [vmem:[#allocation5 + $0x3b0] sm:$0xff]
    %v204 = vld [vmem:[#allocation5 + $0x3b8] sm:$0xff]
    %v205 = vld [vmem:[#allocation5 + $0x3c0] sm:$0xff]
    %v206 = vld [vmem:[#allocation5 + $0x3c8] sm:$0xff]
    %v207 = vld [vmem:[#allocation5 + $0x3d0] sm:$0xff]
    %v208 = vld [vmem:[#allocation5 + $0x3d8] sm:$0xff]
    %v209 = vld [vmem:[#allocation5 + $0x3e0] sm:$0xff]
    %v210 = vld [vmem:[#allocation5 + $0x3e8] sm:$0xff]
    %v211 = vld [vmem:[#allocation5 + $0x3f0] sm:$0xff]
    %v212 = vld [vmem:[#allocation5 + $0x3f8] sm:$0xff]
    %v213 = vld [vmem:[#allocation5 + $0x400] sm:$0xff]
    %v214 = vld [vmem:[#allocation5 + $0x408] sm:$0xff]
    %v215 = vld [vmem:[#allocation5 + $0x410] sm:$0xff]
    %v216 = vld [vmem:[#allocation5 + $0x418] sm:$0xff]
    %v217 = vld [vmem:[#allocation5 + $0x420] sm:$0xff]
    %v218 = vld [vmem:[#allocation5 + $0x428] sm:$0xff]
    %v219 = vld [vmem:[#allocation5 + $0x430] sm:$0xff]
    %v220 = vld [vmem:[#allocation5 + $0x438] sm:$0xff]
    %v221 = vld [vmem:[#allocation5 + $0x440] sm:$0xff]
    %v222 = vld [vmem:[#allocation5 + $0x448] sm:$0xff]
    %v223 = vld [vmem:[#allocation5 + $0x450] sm:$0xff]
    %v224 = vld [vmem:[#allocation5 + $0x458] sm:$0xff]
    %v225 = vld [vmem:[#allocation5 + $0x460] sm:$0xff]
    %v226 = vld [vmem:[#allocation5 + $0x468] sm:$0xff]
    %v227 = vld [vmem:[#allocation5 + $0x470] sm:$0xff]
    %v228 = vld [vmem:[#allocation5 + $0x478] sm:$0xff]
    %v229 = vld [vmem:[#allocation5 + $0x480] sm:$0xff]
    %v230 = vld [vmem:[#allocation5 + $0x488] sm:$0xff]
    %v231 = vld [vmem:[#allocation5 + $0x490] sm:$0xff]
    %v232 = vld [vmem:[#allocation5 + $0x498] sm:$0xff]
    %v233 = vld [vmem:[#allocation5 + $0x4a0] sm:$0xff]
    %v234 = vld [vmem:[#allocation5 + $0x4a8] sm:$0xff]
    %v235 = vld [vmem:[#allocation5 + $0x4b0] sm:$0xff]
    %v236 = vld [vmem:[#allocation5 + $0x4b8] sm:$0xff]
    %v237 = vld [vmem:[#allocation5 + $0x4c0] sm:$0xff]
    %v238 = vld [vmem:[#allocation5 + $0x4c8] sm:$0xff]
    %v239 = vld [vmem:[#allocation5 + $0x4d0] sm:$0xff]
    %v240 = vld [vmem:[#allocation5 + $0x4d8] sm:$0xff]
    %v241 = vld [vmem:[#allocation5 + $0x4e0] sm:$0xff]
    %v242 = vld [vmem:[#allocation5 + $0x4e8] sm:$0xff]
    %v243 = vld [vmem:[#allocation5 + $0x4f0] sm:$0xff]
    %v244 = vld [vmem:[#allocation5 + $0x4f8] sm:$0xff]
    %v245 = vld [vmem:[#allocation5 + $0x500] sm:$0xff]
    %v246 = vld [vmem:[#allocation5 + $0x508] sm:$0xff]
    %v247 = vld [vmem:[#allocation5 + $0x510] sm:$0xff]
    %v248 = vld [vmem:[#allocation5 + $0x518] sm:$0xff]
    %v249 = vld [vmem:[#allocation5 + $0x520] sm:$0xff]
    %v250 = vld [vmem:[#allocation5 + $0x528] sm:$0xff]
    %v251 = vld [vmem:[#allocation5 + $0x530] sm:$0xff]
    %v252 = vld [vmem:[#allocation5 + $0x538] sm:$0xff]
    %v253 = vld [vmem:[#allocation5 + $0x540] sm:$0xff]
    %v254 = vld [vmem:[#allocation5 + $0x548] sm:$0xff]
    %v255 = vld [vmem:[#allocation5 + $0x550] sm:$0xff]
    %v256 = vld [vmem:[#allocation5 + $0x558] sm:$0xff]
    %v257 = vld [vmem:[#allocation5 + $0x560] sm:$0xff]
    %v258 = vld [vmem:[#allocation5 + $0x568] sm:$0xff]
    %v259 = vld [vmem:[#allocation5 + $0x570] sm:$0xff]
    %v260 = vld [vmem:[#allocation5 + $0x578] sm:$0xff]
    %v261 = vld [vmem:[#allocation5 + $0x580] sm:$0xff]
    %v262 = vld [vmem:[#allocation5 + $0x588] sm:$0xff]
    %v263 = vld [vmem:[#allocation5 + $0x590] sm:$0xff]
    %v264 = vld [vmem:[#allocation5 + $0x598] sm:$0xff]
    %v265 = vld [vmem:[#allocation5 + $0x5a0] sm:$0xff]
    %v266 = vld [vmem:[#allocation5 + $0x5a8] sm:$0xff]
    %v267 = vld [vmem:[#allocation5 + $0x5b0] sm:$0xff]
    %v268 = vld [vmem:[#allocation5 + $0x5b8] sm:$0xff]
    %v269 = vld [vmem:[#allocation5 + $0x5c0] sm:$0xff]
    %v270 = vld [vmem:[#allocation5 + $0x5c8] sm:$0xff]
    %v271 = vld [vmem:[#allocation5 + $0x5d0] sm:$0xff]
    %v272 = vld [vmem:[#allocation5 + $0x5d8] sm:$0xff]
    %v273 = vld [vmem:[#allocation5 + $0x5e0] sm:$0xff]
    %v274 = vld [vmem:[#allocation5 + $0x5e8] sm:$0xff]
    %v275 = vld [vmem:[#allocation5 + $0x5f0] sm:$0xff]
    %v276 = vld [vmem:[#allocation5 + $0x5f8] sm:$0xff]
    %v277 = vld [vmem:[#allocation5 + $0x600] sm:$0xff]
    %v278 = vld [vmem:[#allocation5 + $0x608] sm:$0xff]
    %v279 = vld [vmem:[#allocation5 + $0x610] sm:$0xff]
    %v280 = vld [vmem:[#allocation5 + $0x618] sm:$0xff]
    %v281 = vld [vmem:[#allocation5 + $0x620] sm:$0xff]
    %v282 = vld [vmem:[#allocation5 + $0x628] sm:$0xff]
    %v283 = vld [vmem:[#allocation5 + $0x630] sm:$0xff]
    %v284 = vld [vmem:[#allocation5 + $0x638] sm:$0xff]
    %v285 = vld [vmem:[#allocation5 + $0x640] sm:$0xff]
    %v286 = vld [vmem:[#allocation5 + $0x648] sm:$0xff]
    %v287 = vld [vmem:[#allocation5 + $0x650] sm:$0xff]
    %v288 = vld [vmem:[#allocation5 + $0x658] sm:$0xff]
    %v289 = vld [vmem:[#allocation5 + $0x660] sm:$0xff]
    %v290 = vld [vmem:[#allocation5 + $0x668] sm:$0xff]
    %v291 = vld [vmem:[#allocation5 + $0x670] sm:$0xff]
    %v292 = vld [vmem:[#allocation5 + $0x678] sm:$0xff]
    %v293 = vld [vmem:[#allocation5 + $0x680] sm:$0xff]
    %v294 = vld [vmem:[#allocation5 + $0x688] sm:$0xff]
    %v295 = vld [vmem:[#allocation5 + $0x690] sm:$0xff]
    %v296 = vld [vmem:[#allocation5 + $0x698] sm:$0xff]
    %v297 = vld [vmem:[#allocation5 + $0x6a0] sm:$0xff]
    %v298 = vld [vmem:[#allocation5 + $0x6a8] sm:$0xff]
    %v299 = vld [vmem:[#allocation5 + $0x6b0] sm:$0xff]
    %v300 = vld [vmem:[#allocation5 + $0x6b8] sm:$0xff]
    %v301 = vld [vmem:[#allocation5 + $0x6c0] sm:$0xff]
    %v302 = vld [vmem:[#allocation5 + $0x6c8] sm:$0xff]
    %v303 = vld [vmem:[#allocation5 + $0x6d0] sm:$0xff]
    %v304 = vld [vmem:[#allocation5 + $0x6d8] sm:$0xff]
    %v305 = vld [vmem:[#allocation5 + $0x6e0] sm:$0xff]
    %v306 = vld [vmem:[#allocation5 + $0x6e8] sm:$0xff]
    %v307 = vld [vmem:[#allocation5 + $0x6f0] sm:$0xff]
    %v308 = vld [vmem:[#allocation5 + $0x6f8] sm:$0xff]
    %v309 = vld [vmem:[#allocation5 + $0x700] sm:$0xff]
    %v310 = vld [vmem:[#allocation5 + $0x708] sm:$0xff]
    %v311 = vld [vmem:[#allocation5 + $0x710] sm:$0xff]
    %v312 = vld [vmem:[#allocation5 + $0x718] sm:$0xff]
    %v313 = vld [vmem:[#allocation5 + $0x720] sm:$0xff]
    %v314 = vld [vmem:[#allocation5 + $0x728] sm:$0xff]
    %v315 = vld [vmem:[#allocation5 + $0x730] sm:$0xff]
    %v316 = vld [vmem:[#allocation5 + $0x738] sm:$0xff]
    %v317 = vld [vmem:[#allocation5 + $0x740] sm:$0xff]
    %v318 = vld [vmem:[#allocation5 + $0x748] sm:$0xff]
    %v319 = vld [vmem:[#allocation5 + $0x750] sm:$0xff]
    %v320 = vld [vmem:[#allocation5 + $0x758] sm:$0xff]
    %v321 = vld [vmem:[#allocation5 + $0x760] sm:$0xff]
    %v322 = vld [vmem:[#allocation5 + $0x768] sm:$0xff]
    %v323 = vld [vmem:[#allocation5 + $0x770] sm:$0xff]
    %v324 = vld [vmem:[#allocation5 + $0x778] sm:$0xff]
    %v325 = vld [vmem:[#allocation5 + $0x780] sm:$0xff]
    %v326 = vld [vmem:[#allocation5 + $0x788] sm:$0xff]
    %v327 = vld [vmem:[#allocation5 + $0x790] sm:$0xff]
    %v328 = vld [vmem:[#allocation5 + $0x798] sm:$0xff]
    %v329 = vld [vmem:[#allocation5 + $0x7a0] sm:$0xff]
    %v330 = vld [vmem:[#allocation5 + $0x7a8] sm:$0xff]
    %v331 = vld [vmem:[#allocation5 + $0x7b0] sm:$0xff]
    %v332 = vld [vmem:[#allocation5 + $0x7b8] sm:$0xff]
    %v333 = vld [vmem:[#allocation5 + $0x7c0] sm:$0xff]
    %v334 = vld [vmem:[#allocation5 + $0x7c8] sm:$0xff]
    %v335 = vld [vmem:[#allocation5 + $0x7d0] sm:$0xff]
    %v336 = vld [vmem:[#allocation5 + $0x7d8] sm:$0xff]
    %v337 = vld [vmem:[#allocation5 + $0x7e0] sm:$0xff]
    %v338 = vld [vmem:[#allocation5 + $0x7e8] sm:$0xff]
    %v339 = vld [vmem:[#allocation5 + $0x7f0] sm:$0xff]
    %v340 = vld [vmem:[#allocation5 + $0x7f8] sm:$0xff]
    %v341 = vld [vmem:[%s2] sm:$0xf]
    %v343 = vlaneseq
    %v344 = vshrl.u32 %v343, 7
    %v345 = vsub.s32 0, %v344
    %v346 = vrot.slane %v341, %v345
    %v347 = vlaneseq
    %v348 = vshrl.u32 %v347, 7
    %v349 = vsub.s32 1, %v348
    %v350 = vrot.slane %v341, %v349
    %v351 = vlaneseq
    %v352 = vshrl.u32 %v351, 7
    %v353 = vsub.s32 2, %v352
    %v354 = vrot.slane %v341, %v353
    %v355 = vlaneseq
    %v356 = vshrl.u32 %v355, 7
    %v357 = vsub.s32 3, %v356
    %v358 = vrot.slane %v341, %v357
    %v367 = vunpack.c.l.b16 %v81
    %v368 = vunpack.c.h.b16 %v81
    %v369 = vunpack.c.l.b16 %v82
    %v370 = vunpack.c.h.b16 %v82
    %v371 = vunpack.c.l.b16 %v83
    %v372 = vunpack.c.h.b16 %v83
    %v373 = vunpack.c.l.b16 %v84
    %v374 = vunpack.c.h.b16 %v84
    %v375 = vpack.c.b16 %v367, %v367
    %v376 = vpack.c.b16 %v368, %v368
    %v377 = vpack.c.b16 %v369, %v369
    %v378 = vpack.c.b16 %v370, %v370
    %v379 = vpack.c.b16 %v371, %v371
    %v380 = vpack.c.b16 %v372, %v372
    %v381 = vpack.c.b16 %v373, %v373
    %v382 = vpack.c.b16 %v374, %v374
    %v647 = vunpack.c.l.b16 %v85
    %v648 = vunpack.c.h.b16 %v85
    %v649 = vunpack.c.l.b16 %v86
    %v650 = vunpack.c.h.b16 %v86
    %v651 = vunpack.c.l.b16 %v87
    %v652 = vunpack.c.h.b16 %v87
    %v653 = vunpack.c.l.b16 %v88
    %v654 = vunpack.c.h.b16 %v88
    %v655 = vunpack.c.l.b16 %v89
    %v656 = vunpack.c.h.b16 %v89
    %v657 = vunpack.c.l.b16 %v90
    %v658 = vunpack.c.h.b16 %v90
    %v659 = vunpack.c.l.b16 %v91
    %v660 = vunpack.c.h.b16 %v91
    %v661 = vunpack.c.l.b16 %v92
    %v662 = vunpack.c.h.b16 %v92
    %v663 = vunpack.c.l.b16 %v93
    %v664 = vunpack.c.h.b16 %v93
    %v665 = vunpack.c.l.b16 %v94
    %v666 = vunpack.c.h.b16 %v94
    %v667 = vunpack.c.l.b16 %v95
    %v668 = vunpack.c.h.b16 %v95
    %v669 = vunpack.c.l.b16 %v96
    %v670 = vunpack.c.h.b16 %v96
    %v671 = vunpack.c.l.b16 %v97
    %v672 = vunpack.c.h.b16 %v97
    %v673 = vunpack.c.l.b16 %v98
    %v674 = vunpack.c.h.b16 %v98
    %v675 = vunpack.c.l.b16 %v99
    %v676 = vunpack.c.h.b16 %v99
    %v677 = vunpack.c.l.b16 %v100
    %v678 = vunpack.c.h.b16 %v100
    %v679 = vunpack.c.l.b16 %v101
    %v680 = vunpack.c.h.b16 %v101
    %v681 = vunpack.c.l.b16 %v102
    %v682 = vunpack.c.h.b16 %v102
    %v683 = vunpack.c.l.b16 %v103
    %v684 = vunpack.c.h.b16 %v103
    %v685 = vunpack.c.l.b16 %v104
    %v686 = vunpack.c.h.b16 %v104
    %v687 = vunpack.c.l.b16 %v105
    %v688 = vunpack.c.h.b16 %v105
    %v689 = vunpack.c.l.b16 %v106
    %v690 = vunpack.c.h.b16 %v106
    %v691 = vunpack.c.l.b16 %v107
    %v692 = vunpack.c.h.b16 %v107
    %v693 = vunpack.c.l.b16 %v108
    %v694 = vunpack.c.h.b16 %v108
    %v695 = vunpack.c.l.b16 %v109
    %v696 = vunpack.c.h.b16 %v109
    %v697 = vunpack.c.l.b16 %v110
    %v698 = vunpack.c.h.b16 %v110
    %v699 = vunpack.c.l.b16 %v111
    %v700 = vunpack.c.h.b16 %v111
    %v701 = vunpack.c.l.b16 %v112
    %v702 = vunpack.c.h.b16 %v112
    %v703 = vunpack.c.l.b16 %v113
    %v704 = vunpack.c.h.b16 %v113
    %v705 = vunpack.c.l.b16 %v114
    %v706 = vunpack.c.h.b16 %v114
    %v707 = vunpack.c.l.b16 %v115
    %v708 = vunpack.c.h.b16 %v115
    %v709 = vunpack.c.l.b16 %v116
    %v710 = vunpack.c.h.b16 %v116
    %v711 = vunpack.c.l.b16 %v117
    %v712 = vunpack.c.h.b16 %v117
    %v713 = vunpack.c.l.b16 %v118
    %v714 = vunpack.c.h.b16 %v118
    %v715 = vunpack.c.l.b16 %v119
    %v716 = vunpack.c.h.b16 %v119
    %v717 = vunpack.c.l.b16 %v120
    %v718 = vunpack.c.h.b16 %v120
    %v719 = vunpack.c.l.b16 %v121
    %v720 = vunpack.c.h.b16 %v121
    %v721 = vunpack.c.l.b16 %v122
    %v722 = vunpack.c.h.b16 %v122
    %v723 = vunpack.c.l.b16 %v123
    %v724 = vunpack.c.h.b16 %v123
    %v725 = vunpack.c.l.b16 %v124
    %v726 = vunpack.c.h.b16 %v124
    %v727 = vunpack.c.l.b16 %v125
    %v728 = vunpack.c.h.b16 %v125
    %v729 = vunpack.c.l.b16 %v126
    %v730 = vunpack.c.h.b16 %v126
    %v731 = vunpack.c.l.b16 %v127
    %v732 = vunpack.c.h.b16 %v127
    %v733 = vunpack.c.l.b16 %v128
    %v734 = vunpack.c.h.b16 %v128
    %v735 = vunpack.c.l.b16 %v129
    %v736 = vunpack.c.h.b16 %v129
    %v737 = vunpack.c.l.b16 %v130
    %v738 = vunpack.c.h.b16 %v130
    %v739 = vunpack.c.l.b16 %v131
    %v740 = vunpack.c.h.b16 %v131
    %v741 = vunpack.c.l.b16 %v132
    %v742 = vunpack.c.h.b16 %v132
    %v743 = vunpack.c.l.b16 %v133
    %v744 = vunpack.c.h.b16 %v133
    %v745 = vunpack.c.l.b16 %v134
    %v746 = vunpack.c.h.b16 %v134
    %v747 = vunpack.c.l.b16 %v135
    %v748 = vunpack.c.h.b16 %v135
    %v749 = vunpack.c.l.b16 %v136
    %v750 = vunpack.c.h.b16 %v136
    %v751 = vunpack.c.l.b16 %v137
    %v752 = vunpack.c.h.b16 %v137
    %v753 = vunpack.c.l.b16 %v138
    %v754 = vunpack.c.h.b16 %v138
    %v755 = vunpack.c.l.b16 %v139
    %v756 = vunpack.c.h.b16 %v139
    %v757 = vunpack.c.l.b16 %v140
    %v758 = vunpack.c.h.b16 %v140
    %v759 = vunpack.c.l.b16 %v141
    %v760 = vunpack.c.h.b16 %v141
    %v761 = vunpack.c.l.b16 %v142
    %v762 = vunpack.c.h.b16 %v142
    %v763 = vunpack.c.l.b16 %v143
    %v764 = vunpack.c.h.b16 %v143
    %v765 = vunpack.c.l.b16 %v144
    %v766 = vunpack.c.h.b16 %v144
    %v767 = vunpack.c.l.b16 %v145
    %v768 = vunpack.c.h.b16 %v145
    %v769 = vunpack.c.l.b16 %v146
    %v770 = vunpack.c.h.b16 %v146
    %v771 = vunpack.c.l.b16 %v147
    %v772 = vunpack.c.h.b16 %v147
    %v773 = vunpack.c.l.b16 %v148
    %v774 = vunpack.c.h.b16 %v148
    %v775 = vunpack.c.l.b16 %v149
    %v776 = vunpack.c.h.b16 %v149
    %v777 = vunpack.c.l.b16 %v150
    %v778 = vunpack.c.h.b16 %v150
    %v779 = vunpack.c.l.b16 %v151
    %v780 = vunpack.c.h.b16 %v151
    %v781 = vunpack.c.l.b16 %v152
    %v782 = vunpack.c.h.b16 %v152
    %v783 = vunpack.c.l.b16 %v153
    %v784 = vunpack.c.h.b16 %v153
    %v785 = vunpack.c.l.b16 %v154
    %v786 = vunpack.c.h.b16 %v154
    %v787 = vunpack.c.l.b16 %v155
    %v788 = vunpack.c.h.b16 %v155
    %v789 = vunpack.c.l.b16 %v156
    %v790 = vunpack.c.h.b16 %v156
    %v791 = vunpack.c.l.b16 %v157
    %v792 = vunpack.c.h.b16 %v157
    %v793 = vunpack.c.l.b16 %v158
    %v794 = vunpack.c.h.b16 %v158
    %v795 = vunpack.c.l.b16 %v159
    %v796 = vunpack.c.h.b16 %v159
    %v797 = vunpack.c.l.b16 %v160
    %v798 = vunpack.c.h.b16 %v160
    %v799 = vunpack.c.l.b16 %v161
    %v800 = vunpack.c.h.b16 %v161
    %v801 = vunpack.c.l.b16 %v162
    %v802 = vunpack.c.h.b16 %v162
    %v803 = vunpack.c.l.b16 %v163
    %v804 = vunpack.c.h.b16 %v163
    %v805 = vunpack.c.l.b16 %v164
    %v806 = vunpack.c.h.b16 %v164
    %v807 = vunpack.c.l.b16 %v165
    %v808 = vunpack.c.h.b16 %v165
    %v809 = vunpack.c.l.b16 %v166
    %v810 = vunpack.c.h.b16 %v166
    %v811 = vunpack.c.l.b16 %v167
    %v812 = vunpack.c.h.b16 %v167
    %v813 = vunpack.c.l.b16 %v168
    %v814 = vunpack.c.h.b16 %v168
    %v815 = vunpack.c.l.b16 %v169
    %v816 = vunpack.c.h.b16 %v169
    %v817 = vunpack.c.l.b16 %v170
    %v818 = vunpack.c.h.b16 %v170
    %v819 = vunpack.c.l.b16 %v171
    %v820 = vunpack.c.h.b16 %v171
    %v821 = vunpack.c.l.b16 %v172
    %v822 = vunpack.c.h.b16 %v172
    %v823 = vunpack.c.l.b16 %v173
    %v824 = vunpack.c.h.b16 %v173
    %v825 = vunpack.c.l.b16 %v174
    %v826 = vunpack.c.h.b16 %v174
    %v827 = vunpack.c.l.b16 %v175
    %v828 = vunpack.c.h.b16 %v175
    %v829 = vunpack.c.l.b16 %v176
    %v830 = vunpack.c.h.b16 %v176
    %v831 = vunpack.c.l.b16 %v177
    %v832 = vunpack.c.h.b16 %v177
    %v833 = vunpack.c.l.b16 %v178
    %v834 = vunpack.c.h.b16 %v178
    %v835 = vunpack.c.l.b16 %v179
    %v836 = vunpack.c.h.b16 %v179
    %v837 = vunpack.c.l.b16 %v180
    %v838 = vunpack.c.h.b16 %v180
    %v839 = vunpack.c.l.b16 %v181
    %v840 = vunpack.c.h.b16 %v181
    %v841 = vunpack.c.l.b16 %v182
    %v842 = vunpack.c.h.b16 %v182
    %v843 = vunpack.c.l.b16 %v183
    %v844 = vunpack.c.h.b16 %v183
    %v845 = vunpack.c.l.b16 %v184
    %v846 = vunpack.c.h.b16 %v184
    %v847 = vunpack.c.l.b16 %v185
    %v848 = vunpack.c.h.b16 %v185
    %v849 = vunpack.c.l.b16 %v186
    %v850 = vunpack.c.h.b16 %v186
    %v851 = vunpack.c.l.b16 %v187
    %v852 = vunpack.c.h.b16 %v187
    %v853 = vunpack.c.l.b16 %v188
    %v854 = vunpack.c.h.b16 %v188
    %v855 = vunpack.c.l.b16 %v189
    %v856 = vunpack.c.h.b16 %v189
    %v857 = vunpack.c.l.b16 %v190
    %v858 = vunpack.c.h.b16 %v190
    %v859 = vunpack.c.l.b16 %v191
    %v860 = vunpack.c.h.b16 %v191
    %v861 = vunpack.c.l.b16 %v192
    %v862 = vunpack.c.h.b16 %v192
    %v863 = vunpack.c.l.b16 %v193
    %v864 = vunpack.c.h.b16 %v193
    %v865 = vunpack.c.l.b16 %v194
    %v866 = vunpack.c.h.b16 %v194
    %v867 = vunpack.c.l.b16 %v195
    %v868 = vunpack.c.h.b16 %v195
    %v869 = vunpack.c.l.b16 %v196
    %v870 = vunpack.c.h.b16 %v196
    %v871 = vunpack.c.l.b16 %v197
    %v872 = vunpack.c.h.b16 %v197
    %v873 = vunpack.c.l.b16 %v198
    %v874 = vunpack.c.h.b16 %v198
    %v875 = vunpack.c.l.b16 %v199
    %v876 = vunpack.c.h.b16 %v199
    %v877 = vunpack.c.l.b16 %v200
    %v878 = vunpack.c.h.b16 %v200
    %v879 = vunpack.c.l.b16 %v201
    %v880 = vunpack.c.h.b16 %v201
    %v881 = vunpack.c.l.b16 %v202
    %v882 = vunpack.c.h.b16 %v202
    %v883 = vunpack.c.l.b16 %v203
    %v884 = vunpack.c.h.b16 %v203
    %v885 = vunpack.c.l.b16 %v204
    %v886 = vunpack.c.h.b16 %v204
    %v887 = vunpack.c.l.b16 %v205
    %v888 = vunpack.c.h.b16 %v205
    %v889 = vunpack.c.l.b16 %v206
    %v890 = vunpack.c.h.b16 %v206
    %v891 = vunpack.c.l.b16 %v207
    %v892 = vunpack.c.h.b16 %v207
    %v893 = vunpack.c.l.b16 %v208
    %v894 = vunpack.c.h.b16 %v208
    %v895 = vunpack.c.l.b16 %v209
    %v896 = vunpack.c.h.b16 %v209
    %v897 = vunpack.c.l.b16 %v210
    %v898 = vunpack.c.h.b16 %v210
    %v899 = vunpack.c.l.b16 %v211
    %v900 = vunpack.c.h.b16 %v211
    %v901 = vunpack.c.l.b16 %v212
    %v902 = vunpack.c.h.b16 %v212
    %v903 = vunpack.c.l.b16 %v213
    %v904 = vunpack.c.h.b16 %v213
    %v905 = vunpack.c.l.b16 %v214
    %v906 = vunpack.c.h.b16 %v214
    %v907 = vunpack.c.l.b16 %v215
    %v908 = vunpack.c.h.b16 %v215
    %v909 = vunpack.c.l.b16 %v216
    %v910 = vunpack.c.h.b16 %v216
    %v911 = vunpack.c.l.b16 %v217
    %v912 = vunpack.c.h.b16 %v217
    %v913 = vunpack.c.l.b16 %v218
    %v914 = vunpack.c.h.b16 %v218
    %v915 = vunpack.c.l.b16 %v219
    %v916 = vunpack.c.h.b16 %v219
    %v917 = vunpack.c.l.b16 %v220
    %v918 = vunpack.c.h.b16 %v220
    %v919 = vunpack.c.l.b16 %v221
    %v920 = vunpack.c.h.b16 %v221
    %v921 = vunpack.c.l.b16 %v222
    %v922 = vunpack.c.h.b16 %v222
    %v923 = vunpack.c.l.b16 %v223
    %v924 = vunpack.c.h.b16 %v223
    %v925 = vunpack.c.l.b16 %v224
    %v926 = vunpack.c.h.b16 %v224
    %v927 = vunpack.c.l.b16 %v225
    %v928 = vunpack.c.h.b16 %v225
    %v929 = vunpack.c.l.b16 %v226
    %v930 = vunpack.c.h.b16 %v226
    %v931 = vunpack.c.l.b16 %v227
    %v932 = vunpack.c.h.b16 %v227
    %v933 = vunpack.c.l.b16 %v228
    %v934 = vunpack.c.h.b16 %v228
    %v935 = vunpack.c.l.b16 %v229
    %v936 = vunpack.c.h.b16 %v229
    %v937 = vunpack.c.l.b16 %v230
    %v938 = vunpack.c.h.b16 %v230
    %v939 = vunpack.c.l.b16 %v231
    %v940 = vunpack.c.h.b16 %v231
    %v941 = vunpack.c.l.b16 %v232
    %v942 = vunpack.c.h.b16 %v232
    %v943 = vunpack.c.l.b16 %v233
    %v944 = vunpack.c.h.b16 %v233
    %v945 = vunpack.c.l.b16 %v234
    %v946 = vunpack.c.h.b16 %v234
    %v947 = vunpack.c.l.b16 %v235
    %v948 = vunpack.c.h.b16 %v235
    %v949 = vunpack.c.l.b16 %v236
    %v950 = vunpack.c.h.b16 %v236
    %v951 = vunpack.c.l.b16 %v237
    %v952 = vunpack.c.h.b16 %v237
    %v953 = vunpack.c.l.b16 %v238
    %v954 = vunpack.c.h.b16 %v238
    %v955 = vunpack.c.l.b16 %v239
    %v956 = vunpack.c.h.b16 %v239
    %v957 = vunpack.c.l.b16 %v240
    %v958 = vunpack.c.h.b16 %v240
    %v959 = vunpack.c.l.b16 %v241
    %v960 = vunpack.c.h.b16 %v241
    %v961 = vunpack.c.l.b16 %v242
    %v962 = vunpack.c.h.b16 %v242
    %v963 = vunpack.c.l.b16 %v243
    %v964 = vunpack.c.h.b16 %v243
    %v965 = vunpack.c.l.b16 %v244
    %v966 = vunpack.c.h.b16 %v244
    %v967 = vunpack.c.l.b16 %v245
    %v968 = vunpack.c.h.b16 %v245
    %v969 = vunpack.c.l.b16 %v246
    %v970 = vunpack.c.h.b16 %v246
    %v971 = vunpack.c.l.b16 %v247
    %v972 = vunpack.c.h.b16 %v247
    %v973 = vunpack.c.l.b16 %v248
    %v974 = vunpack.c.h.b16 %v248
    %v975 = vunpack.c.l.b16 %v249
    %v976 = vunpack.c.h.b16 %v249
    %v977 = vunpack.c.l.b16 %v250
    %v978 = vunpack.c.h.b16 %v250
    %v979 = vunpack.c.l.b16 %v251
    %v980 = vunpack.c.h.b16 %v251
    %v981 = vunpack.c.l.b16 %v252
    %v982 = vunpack.c.h.b16 %v252
    %v983 = vunpack.c.l.b16 %v253
    %v984 = vunpack.c.h.b16 %v253
    %v985 = vunpack.c.l.b16 %v254
    %v986 = vunpack.c.h.b16 %v254
    %v987 = vunpack.c.l.b16 %v255
    %v988 = vunpack.c.h.b16 %v255
    %v989 = vunpack.c.l.b16 %v256
    %v990 = vunpack.c.h.b16 %v256
    %v991 = vunpack.c.l.b16 %v257
    %v992 = vunpack.c.h.b16 %v257
    %v993 = vunpack.c.l.b16 %v258
    %v994 = vunpack.c.h.b16 %v258
    %v995 = vunpack.c.l.b16 %v259
    %v996 = vunpack.c.h.b16 %v259
    %v997 = vunpack.c.l.b16 %v260
    %v998 = vunpack.c.h.b16 %v260
    %v999 = vunpack.c.l.b16 %v261
    %v1000 = vunpack.c.h.b16 %v261
    %v1001 = vunpack.c.l.b16 %v262
    %v1002 = vunpack.c.h.b16 %v262
    %v1003 = vunpack.c.l.b16 %v263
    %v1004 = vunpack.c.h.b16 %v263
    %v1005 = vunpack.c.l.b16 %v264
    %v1006 = vunpack.c.h.b16 %v264
    %v1007 = vunpack.c.l.b16 %v265
    %v1008 = vunpack.c.h.b16 %v265
    %v1009 = vunpack.c.l.b16 %v266
    %v1010 = vunpack.c.h.b16 %v266
    %v1011 = vunpack.c.l.b16 %v267
    %v1012 = vunpack.c.h.b16 %v267
    %v1013 = vunpack.c.l.b16 %v268
    %v1014 = vunpack.c.h.b16 %v268
    %v1015 = vunpack.c.l.b16 %v269
    %v1016 = vunpack.c.h.b16 %v269
    %v1017 = vunpack.c.l.b16 %v270
    %v1018 = vunpack.c.h.b16 %v270
    %v1019 = vunpack.c.l.b16 %v271
    %v1020 = vunpack.c.h.b16 %v271
    %v1021 = vunpack.c.l.b16 %v272
    %v1022 = vunpack.c.h.b16 %v272
    %v1023 = vunpack.c.l.b16 %v273
    %v1024 = vunpack.c.h.b16 %v273
    %v1025 = vunpack.c.l.b16 %v274
    %v1026 = vunpack.c.h.b16 %v274
    %v1027 = vunpack.c.l.b16 %v275
    %v1028 = vunpack.c.h.b16 %v275
    %v1029 = vunpack.c.l.b16 %v276
    %v1030 = vunpack.c.h.b16 %v276
    %v1031 = vunpack.c.l.b16 %v277
    %v1032 = vunpack.c.h.b16 %v277
    %v1033 = vunpack.c.l.b16 %v278
    %v1034 = vunpack.c.h.b16 %v278
    %v1035 = vunpack.c.l.b16 %v279
    %v1036 = vunpack.c.h.b16 %v279
    %v1037 = vunpack.c.l.b16 %v280
    %v1038 = vunpack.c.h.b16 %v280
    %v1039 = vunpack.c.l.b16 %v281
    %v1040 = vunpack.c.h.b16 %v281
    %v1041 = vunpack.c.l.b16 %v282
    %v1042 = vunpack.c.h.b16 %v282
    %v1043 = vunpack.c.l.b16 %v283
    %v1044 = vunpack.c.h.b16 %v283
    %v1045 = vunpack.c.l.b16 %v284
    %v1046 = vunpack.c.h.b16 %v284
    %v1047 = vunpack.c.l.b16 %v285
    %v1048 = vunpack.c.h.b16 %v285
    %v1049 = vunpack.c.l.b16 %v286
    %v1050 = vunpack.c.h.b16 %v286
    %v1051 = vunpack.c.l.b16 %v287
    %v1052 = vunpack.c.h.b16 %v287
    %v1053 = vunpack.c.l.b16 %v288
    %v1054 = vunpack.c.h.b16 %v288
    %v1055 = vunpack.c.l.b16 %v289
    %v1056 = vunpack.c.h.b16 %v289
    %v1057 = vunpack.c.l.b16 %v290
    %v1058 = vunpack.c.h.b16 %v290
    %v1059 = vunpack.c.l.b16 %v291
    %v1060 = vunpack.c.h.b16 %v291
    %v1061 = vunpack.c.l.b16 %v292
    %v1062 = vunpack.c.h.b16 %v292
    %v1063 = vunpack.c.l.b16 %v293
    %v1064 = vunpack.c.h.b16 %v293
    %v1065 = vunpack.c.l.b16 %v294
    %v1066 = vunpack.c.h.b16 %v294
    %v1067 = vunpack.c.l.b16 %v295
    %v1068 = vunpack.c.h.b16 %v295
    %v1069 = vunpack.c.l.b16 %v296
    %v1070 = vunpack.c.h.b16 %v296
    %v1071 = vunpack.c.l.b16 %v297
    %v1072 = vunpack.c.h.b16 %v297
    %v1073 = vunpack.c.l.b16 %v298
    %v1074 = vunpack.c.h.b16 %v298
    %v1075 = vunpack.c.l.b16 %v299
    %v1076 = vunpack.c.h.b16 %v299
    %v1077 = vunpack.c.l.b16 %v300
    %v1078 = vunpack.c.h.b16 %v300
    %v1079 = vunpack.c.l.b16 %v301
    %v1080 = vunpack.c.h.b16 %v301
    %v1081 = vunpack.c.l.b16 %v302
    %v1082 = vunpack.c.h.b16 %v302
    %v1083 = vunpack.c.l.b16 %v303
    %v1084 = vunpack.c.h.b16 %v303
    %v1085 = vunpack.c.l.b16 %v304
    %v1086 = vunpack.c.h.b16 %v304
    %v1087 = vunpack.c.l.b16 %v305
    %v1088 = vunpack.c.h.b16 %v305
    %v1089 = vunpack.c.l.b16 %v306
    %v1090 = vunpack.c.h.b16 %v306
    %v1091 = vunpack.c.l.b16 %v307
    %v1092 = vunpack.c.h.b16 %v307
    %v1093 = vunpack.c.l.b16 %v308
    %v1094 = vunpack.c.h.b16 %v308
    %v1095 = vunpack.c.l.b16 %v309
    %v1096 = vunpack.c.h.b16 %v309
    %v1097 = vunpack.c.l.b16 %v310
    %v1098 = vunpack.c.h.b16 %v310
    %v1099 = vunpack.c.l.b16 %v311
    %v1100 = vunpack.c.h.b16 %v311
    %v1101 = vunpack.c.l.b16 %v312
    %v1102 = vunpack.c.h.b16 %v312
    %v1103 = vunpack.c.l.b16 %v313
    %v1104 = vunpack.c.h.b16 %v313
    %v1105 = vunpack.c.l.b16 %v314
    %v1106 = vunpack.c.h.b16 %v314
    %v1107 = vunpack.c.l.b16 %v315
    %v1108 = vunpack.c.h.b16 %v315
    %v1109 = vunpack.c.l.b16 %v316
    %v1110 = vunpack.c.h.b16 %v316
    %v1111 = vunpack.c.l.b16 %v317
    %v1112 = vunpack.c.h.b16 %v317
    %v1113 = vunpack.c.l.b16 %v318
    %v1114 = vunpack.c.h.b16 %v318
    %v1115 = vunpack.c.l.b16 %v319
    %v1116 = vunpack.c.h.b16 %v319
    %v1117 = vunpack.c.l.b16 %v320
    %v1118 = vunpack.c.h.b16 %v320
    %v1119 = vunpack.c.l.b16 %v321
    %v1120 = vunpack.c.h.b16 %v321
    %v1121 = vunpack.c.l.b16 %v322
    %v1122 = vunpack.c.h.b16 %v322
    %v1123 = vunpack.c.l.b16 %v323
    %v1124 = vunpack.c.h.b16 %v323
    %v1125 = vunpack.c.l.b16 %v324
    %v1126 = vunpack.c.h.b16 %v324
    %v1127 = vunpack.c.l.b16 %v325
    %v1128 = vunpack.c.h.b16 %v325
    %v1129 = vunpack.c.l.b16 %v326
    %v1130 = vunpack.c.h.b16 %v326
    %v1131 = vunpack.c.l.b16 %v327
    %v1132 = vunpack.c.h.b16 %v327
    %v1133 = vunpack.c.l.b16 %v328
    %v1134 = vunpack.c.h.b16 %v328
    %v1135 = vunpack.c.l.b16 %v329
    %v1136 = vunpack.c.h.b16 %v329
    %v1137 = vunpack.c.l.b16 %v330
    %v1138 = vunpack.c.h.b16 %v330
    %v1139 = vunpack.c.l.b16 %v331
    %v1140 = vunpack.c.h.b16 %v331
    %v1141 = vunpack.c.l.b16 %v332
    %v1142 = vunpack.c.h.b16 %v332
    %v1143 = vunpack.c.l.b16 %v333
    %v1144 = vunpack.c.h.b16 %v333
    %v1145 = vunpack.c.l.b16 %v334
    %v1146 = vunpack.c.h.b16 %v334
    %v1147 = vunpack.c.l.b16 %v335
    %v1148 = vunpack.c.h.b16 %v335
    %v1149 = vunpack.c.l.b16 %v336
    %v1150 = vunpack.c.h.b16 %v336
    %v1151 = vunpack.c.l.b16 %v337
    %v1152 = vunpack.c.h.b16 %v337
    %v1153 = vunpack.c.l.b16 %v338
    %v1154 = vunpack.c.h.b16 %v338
    %v1155 = vunpack.c.l.b16 %v339
    %v1156 = vunpack.c.h.b16 %v339
    %v1157 = vunpack.c.l.b16 %v340
    %v1158 = vunpack.c.h.b16 %v340
    %v1159 = vpack.c.b16 %v651, %v647
    %v1160 = vpack.c.b16 %v652, %v648
    %v1161 = vpack.c.b16 %v653, %v649
    %v1162 = vpack.c.b16 %v654, %v650
    %v1163 = vpack.c.b16 %v659, %v655
    %v1164 = vpack.c.b16 %v660, %v656
    %v1165 = vpack.c.b16 %v661, %v657
    %v1166 = vpack.c.b16 %v662, %v658
    %v1167 = vpack.c.b16 %v667, %v663
    %v1168 = vpack.c.b16 %v668, %v664
    %v1169 = vpack.c.b16 %v669, %v665
    %v1170 = vpack.c.b16 %v670, %v666
    %v1171 = vpack.c.b16 %v675, %v671
    %v1172 = vpack.c.b16 %v676, %v672
    %v1173 = vpack.c.b16 %v677, %v673
    %v1174 = vpack.c.b16 %v678, %v674
    %v1175 = vpack.c.b16 %v683, %v679
    %v1176 = vpack.c.b16 %v684, %v680
    %v1177 = vpack.c.b16 %v685, %v681
    %v1178 = vpack.c.b16 %v686, %v682
    %v1179 = vpack.c.b16 %v691, %v687
    %v1180 = vpack.c.b16 %v692, %v688
    %v1181 = vpack.c.b16 %v693, %v689
    %v1182 = vpack.c.b16 %v694, %v690
    %v1183 = vpack.c.b16 %v699, %v695
    %v1184 = vpack.c.b16 %v700, %v696
    %v1185 = vpack.c.b16 %v701, %v697
    %v1186 = vpack.c.b16 %v702, %v698
    %v1187 = vpack.c.b16 %v707, %v703
    %v1188 = vpack.c.b16 %v708, %v704
    %v1189 = vpack.c.b16 %v709, %v705
    %v1190 = vpack.c.b16 %v710, %v706
    %v1191 = vpack.c.b16 %v715, %v711
    %v1192 = vpack.c.b16 %v716, %v712
    %v1193 = vpack.c.b16 %v717, %v713
    %v1194 = vpack.c.b16 %v718, %v714
    %v1195 = vpack.c.b16 %v723, %v719
    %v1196 = vpack.c.b16 %v724, %v720
    %v1197 = vpack.c.b16 %v725, %v721
    %v1198 = vpack.c.b16 %v726, %v722
    %v1199 = vpack.c.b16 %v731, %v727
    %v1200 = vpack.c.b16 %v732, %v728
    %v1201 = vpack.c.b16 %v733, %v729
    %v1202 = vpack.c.b16 %v734, %v730
    %v1203 = vpack.c.b16 %v739, %v735
    %v1204 = vpack.c.b16 %v740, %v736
    %v1205 = vpack.c.b16 %v741, %v737
    %v1206 = vpack.c.b16 %v742, %v738
    %v1207 = vpack.c.b16 %v747, %v743
    %v1208 = vpack.c.b16 %v748, %v744
    %v1209 = vpack.c.b16 %v749, %v745
    %v1210 = vpack.c.b16 %v750, %v746
    %v1211 = vpack.c.b16 %v755, %v751
    %v1212 = vpack.c.b16 %v756, %v752
    %v1213 = vpack.c.b16 %v757, %v753
    %v1214 = vpack.c.b16 %v758, %v754
    %v1215 = vpack.c.b16 %v763, %v759
    %v1216 = vpack.c.b16 %v764, %v760
    %v1217 = vpack.c.b16 %v765, %v761
    %v1218 = vpack.c.b16 %v766, %v762
    %v1219 = vpack.c.b16 %v771, %v767
    %v1220 = vpack.c.b16 %v772, %v768
    %v1221 = vpack.c.b16 %v773, %v769
    %v1222 = vpack.c.b16 %v774, %v770
    %v1223 = vpack.c.b16 %v779, %v775
    %v1224 = vpack.c.b16 %v780, %v776
    %v1225 = vpack.c.b16 %v781, %v777
    %v1226 = vpack.c.b16 %v782, %v778
    %v1227 = vpack.c.b16 %v787, %v783
    %v1228 = vpack.c.b16 %v788, %v784
    %v1229 = vpack.c.b16 %v789, %v785
    %v1230 = vpack.c.b16 %v790, %v786
    %v1231 = vpack.c.b16 %v795, %v791
    %v1232 = vpack.c.b16 %v796, %v792
    %v1233 = vpack.c.b16 %v797, %v793
    %v1234 = vpack.c.b16 %v798, %v794
    %v1235 = vpack.c.b16 %v803, %v799
    %v1236 = vpack.c.b16 %v804, %v800
    %v1237 = vpack.c.b16 %v805, %v801
    %v1238 = vpack.c.b16 %v806, %v802
    %v1239 = vpack.c.b16 %v811, %v807
    %v1240 = vpack.c.b16 %v812, %v808
    %v1241 = vpack.c.b16 %v813, %v809
    %v1242 = vpack.c.b16 %v814, %v810
    %v1243 = vpack.c.b16 %v819, %v815
    %v1244 = vpack.c.b16 %v820, %v816
    %v1245 = vpack.c.b16 %v821, %v817
    %v1246 = vpack.c.b16 %v822, %v818
    %v1247 = vpack.c.b16 %v827, %v823
    %v1248 = vpack.c.b16 %v828, %v824
    %v1249 = vpack.c.b16 %v829, %v825
    %v1250 = vpack.c.b16 %v830, %v826
    %v1251 = vpack.c.b16 %v835, %v831
    %v1252 = vpack.c.b16 %v836, %v832
    %v1253 = vpack.c.b16 %v837, %v833
    %v1254 = vpack.c.b16 %v838, %v834
    %v1255 = vpack.c.b16 %v843, %v839
    %v1256 = vpack.c.b16 %v844, %v840
    %v1257 = vpack.c.b16 %v845, %v841
    %v1258 = vpack.c.b16 %v846, %v842
    %v1259 = vpack.c.b16 %v851, %v847
    %v1260 = vpack.c.b16 %v852, %v848
    %v1261 = vpack.c.b16 %v853, %v849
    %v1262 = vpack.c.b16 %v854, %v850
    %v1263 = vpack.c.b16 %v859, %v855
    %v1264 = vpack.c.b16 %v860, %v856
    %v1265 = vpack.c.b16 %v861, %v857
    %v1266 = vpack.c.b16 %v862, %v858
    %v1267 = vpack.c.b16 %v867, %v863
    %v1268 = vpack.c.b16 %v868, %v864
    %v1269 = vpack.c.b16 %v869, %v865
    %v1270 = vpack.c.b16 %v870, %v866
    %v1271 = vpack.c.b16 %v875, %v871
    %v1272 = vpack.c.b16 %v876, %v872
    %v1273 = vpack.c.b16 %v877, %v873
    %v1274 = vpack.c.b16 %v878, %v874
    %v1275 = vpack.c.b16 %v883, %v879
    %v1276 = vpack.c.b16 %v884, %v880
    %v1277 = vpack.c.b16 %v885, %v881
    %v1278 = vpack.c.b16 %v886, %v882
    %v1279 = vpack.c.b16 %v891, %v887
    %v1280 = vpack.c.b16 %v892, %v888
    %v1281 = vpack.c.b16 %v893, %v889
    %v1282 = vpack.c.b16 %v894, %v890
    %v1283 = vpack.c.b16 %v899, %v895
    %v1284 = vpack.c.b16 %v900, %v896
    %v1285 = vpack.c.b16 %v901, %v897
    %v1286 = vpack.c.b16 %v902, %v898
    %v1287 = vpack.c.b16 %v907, %v903
    %v1288 = vpack.c.b16 %v908, %v904
    %v1289 = vpack.c.b16 %v909, %v905
    %v1290 = vpack.c.b16 %v910, %v906
    %v1291 = vpack.c.b16 %v915, %v911
    %v1292 = vpack.c.b16 %v916, %v912
    %v1293 = vpack.c.b16 %v917, %v913
    %v1294 = vpack.c.b16 %v918, %v914
    %v1295 = vpack.c.b16 %v923, %v919
    %v1296 = vpack.c.b16 %v924, %v920
    %v1297 = vpack.c.b16 %v925, %v921
    %v1298 = vpack.c.b16 %v926, %v922
    %v1299 = vpack.c.b16 %v931, %v927
    %v1300 = vpack.c.b16 %v932, %v928
    %v1301 = vpack.c.b16 %v933, %v929
    %v1302 = vpack.c.b16 %v934, %v930
    %v1303 = vpack.c.b16 %v939, %v935
    %v1304 = vpack.c.b16 %v940, %v936
    %v1305 = vpack.c.b16 %v941, %v937
    %v1306 = vpack.c.b16 %v942, %v938
    %v1307 = vpack.c.b16 %v947, %v943
    %v1308 = vpack.c.b16 %v948, %v944
    %v1309 = vpack.c.b16 %v949, %v945
    %v1310 = vpack.c.b16 %v950, %v946
    %v1311 = vpack.c.b16 %v955, %v951
    %v1312 = vpack.c.b16 %v956, %v952
    %v1313 = vpack.c.b16 %v957, %v953
    %v1314 = vpack.c.b16 %v958, %v954
    %v1315 = vpack.c.b16 %v963, %v959
    %v1316 = vpack.c.b16 %v964, %v960
    %v1317 = vpack.c.b16 %v965, %v961
    %v1318 = vpack.c.b16 %v966, %v962
    %v1319 = vpack.c.b16 %v971, %v967
    %v1320 = vpack.c.b16 %v972, %v968
    %v1321 = vpack.c.b16 %v973, %v969
    %v1322 = vpack.c.b16 %v974, %v970
    %v1323 = vpack.c.b16 %v979, %v975
    %v1324 = vpack.c.b16 %v980, %v976
    %v1325 = vpack.c.b16 %v981, %v977
    %v1326 = vpack.c.b16 %v982, %v978
    %v1327 = vpack.c.b16 %v987, %v983
    %v1328 = vpack.c.b16 %v988, %v984
    %v1329 = vpack.c.b16 %v989, %v985
    %v1330 = vpack.c.b16 %v990, %v986
    %v1331 = vpack.c.b16 %v995, %v991
    %v1332 = vpack.c.b16 %v996, %v992
    %v1333 = vpack.c.b16 %v997, %v993
    %v1334 = vpack.c.b16 %v998, %v994
    %v1335 = vpack.c.b16 %v1003, %v999
    %v1336 = vpack.c.b16 %v1004, %v1000
    %v1337 = vpack.c.b16 %v1005, %v1001
    %v1338 = vpack.c.b16 %v1006, %v1002
    %v1339 = vpack.c.b16 %v1011, %v1007
    %v1340 = vpack.c.b16 %v1012, %v1008
    %v1341 = vpack.c.b16 %v1013, %v1009
    %v1342 = vpack.c.b16 %v1014, %v1010
    %v1343 = vpack.c.b16 %v1019, %v1015
    %v1344 = vpack.c.b16 %v1020, %v1016
    %v1345 = vpack.c.b16 %v1021, %v1017
    %v1346 = vpack.c.b16 %v1022, %v1018
    %v1347 = vpack.c.b16 %v1027, %v1023
    %v1348 = vpack.c.b16 %v1028, %v1024
    %v1349 = vpack.c.b16 %v1029, %v1025
    %v1350 = vpack.c.b16 %v1030, %v1026
    %v1351 = vpack.c.b16 %v1035, %v1031
    %v1352 = vpack.c.b16 %v1036, %v1032
    %v1353 = vpack.c.b16 %v1037, %v1033
    %v1354 = vpack.c.b16 %v1038, %v1034
    %v1355 = vpack.c.b16 %v1043, %v1039
    %v1356 = vpack.c.b16 %v1044, %v1040
    %v1357 = vpack.c.b16 %v1045, %v1041
    %v1358 = vpack.c.b16 %v1046, %v1042
    %v1359 = vpack.c.b16 %v1051, %v1047
    %v1360 = vpack.c.b16 %v1052, %v1048
    %v1361 = vpack.c.b16 %v1053, %v1049
    %v1362 = vpack.c.b16 %v1054, %v1050
    %v1363 = vpack.c.b16 %v1059, %v1055
    %v1364 = vpack.c.b16 %v1060, %v1056
    %v1365 = vpack.c.b16 %v1061, %v1057
    %v1366 = vpack.c.b16 %v1062, %v1058
    %v1367 = vpack.c.b16 %v1067, %v1063
    %v1368 = vpack.c.b16 %v1068, %v1064
    %v1369 = vpack.c.b16 %v1069, %v1065
    %v1370 = vpack.c.b16 %v1070, %v1066
    %v1371 = vpack.c.b16 %v1075, %v1071
    %v1372 = vpack.c.b16 %v1076, %v1072
    %v1373 = vpack.c.b16 %v1077, %v1073
    %v1374 = vpack.c.b16 %v1078, %v1074
    %v1375 = vpack.c.b16 %v1083, %v1079
    %v1376 = vpack.c.b16 %v1084, %v1080
    %v1377 = vpack.c.b16 %v1085, %v1081
    %v1378 = vpack.c.b16 %v1086, %v1082
    %v1379 = vpack.c.b16 %v1091, %v1087
    %v1380 = vpack.c.b16 %v1092, %v1088
    %v1381 = vpack.c.b16 %v1093, %v1089
    %v1382 = vpack.c.b16 %v1094, %v1090
    %v1383 = vpack.c.b16 %v1099, %v1095
    %v1384 = vpack.c.b16 %v1100, %v1096
    %v1385 = vpack.c.b16 %v1101, %v1097
    %v1386 = vpack.c.b16 %v1102, %v1098
    %v1387 = vpack.c.b16 %v1107, %v1103
    %v1388 = vpack.c.b16 %v1108, %v1104
    %v1389 = vpack.c.b16 %v1109, %v1105
    %v1390 = vpack.c.b16 %v1110, %v1106
    %v1391 = vpack.c.b16 %v1115, %v1111
    %v1392 = vpack.c.b16 %v1116, %v1112
    %v1393 = vpack.c.b16 %v1117, %v1113
    %v1394 = vpack.c.b16 %v1118, %v1114
    %v1395 = vpack.c.b16 %v1123, %v1119
    %v1396 = vpack.c.b16 %v1124, %v1120
    %v1397 = vpack.c.b16 %v1125, %v1121
    %v1398 = vpack.c.b16 %v1126, %v1122
    %v1399 = vpack.c.b16 %v1131, %v1127
    %v1400 = vpack.c.b16 %v1132, %v1128
    %v1401 = vpack.c.b16 %v1133, %v1129
    %v1402 = vpack.c.b16 %v1134, %v1130
    %v1403 = vpack.c.b16 %v1139, %v1135
    %v1404 = vpack.c.b16 %v1140, %v1136
    %v1405 = vpack.c.b16 %v1141, %v1137
    %v1406 = vpack.c.b16 %v1142, %v1138
    %v1407 = vpack.c.b16 %v1147, %v1143
    %v1408 = vpack.c.b16 %v1148, %v1144
    %v1409 = vpack.c.b16 %v1149, %v1145
    %v1410 = vpack.c.b16 %v1150, %v1146
    %v1411 = vpack.c.b16 %v1155, %v1151
    %v1412 = vpack.c.b16 %v1156, %v1152
    %v1413 = vpack.c.b16 %v1157, %v1153
    %v1414 = vpack.c.b16 %v1158, %v1154
    %1671 = vmatprep.subr.bf16.mxu0 %v1160
    %1672 = vmatpush1.bf16.msra.mxu0 %v1159
    %1673 = vmatprep.subr.bf16.mxu0 %v1164
    %1674 = vmatpush1.bf16.msra.mxu0 %v1163
    %1675 = vmatprep.subr.bf16.mxu0 %v1168
    %1676 = vmatpush1.bf16.msra.mxu0 %v1167
    %1677 = vmatprep.subr.bf16.mxu0 %v1172
    %1678 = vmatpush1.bf16.msra.mxu0 %v1171
    %1679 = vmatprep.subr.bf16.mxu0 %v1176
    %1680 = vmatpush1.bf16.msra.mxu0 %v1175
    %1681 = vmatprep.subr.bf16.mxu0 %v1180
    %1682 = vmatpush1.bf16.msra.mxu0 %v1179
    %1683 = vmatprep.subr.bf16.mxu0 %v1184
    %1684 = vmatpush1.bf16.msra.mxu0 %v1183
    %1685 = vmatprep.subr.bf16.mxu0 %v1188
    %1686 = vmatpush1.bf16.msra.mxu0 %v1187
    %1687 = vmatprep.subr.bf16.mxu0 %v1192
    %1688 = vmatpush1.bf16.msra.mxu0 %v1191
    %1689 = vmatprep.subr.bf16.mxu0 %v1196
    %1690 = vmatpush1.bf16.msra.mxu0 %v1195
    %1691 = vmatprep.subr.bf16.mxu0 %v1200
    %1692 = vmatpush1.bf16.msra.mxu0 %v1199
    %1693 = vmatprep.subr.bf16.mxu0 %v1204
    %1694 = vmatpush1.bf16.msra.mxu0 %v1203
    %1695 = vmatprep.subr.bf16.mxu0 %v1208
    %1696 = vmatpush1.bf16.msra.mxu0 %v1207
    %1697 = vmatprep.subr.bf16.mxu0 %v1212
    %1698 = vmatpush1.bf16.msra.mxu0 %v1211
    %1699 = vmatprep.subr.bf16.mxu0 %v1216
    %1700 = vmatpush1.bf16.msra.mxu0 %v1215
    %1701 = vmatprep.subr.bf16.mxu0 %v1220
    %1702 = vmatpush1.bf16.msra.mxu0 %v1219
    %1703 = vmatprep.mubr.bf16.mxu0 %v376
    %1704 = vmatmul.mubr.bf16.gmra.mrb[0].mxu0 %v375
    %v1705 = vpop.f32.mrb[0].mxu0
    %v1706 = vadd.f32 %v346, %v1705
    %v1707 = vpop.f32.mrb[0].mxu0
    %v1708 = vadd.f32 %v350, %v1707
    %v1709 = vpop.f32.mrb[0].mxu0
    %v1710 = vpop.f32.mrb[0].mxu0
    %1711 = vdwg.mxu0
    %1712 = vmatprep.subr.bf16.mxu0 %v1224
    %1713 = vmatpush1.bf16.msra.mxu0 %v1223
    %1714 = vmatprep.subr.bf16.mxu0 %v1228
    %1715 = vmatpush1.bf16.msra.mxu0 %v1227
    %1716 = vmatprep.subr.bf16.mxu0 %v1232
    %1717 = vmatpush1.bf16.msra.mxu0 %v1231
    %1718 = vmatprep.subr.bf16.mxu0 %v1236
    %1719 = vmatpush1.bf16.msra.mxu0 %v1235
    %1720 = vmatprep.subr.bf16.mxu0 %v1240
    %1721 = vmatpush1.bf16.msra.mxu0 %v1239
    %1722 = vmatprep.subr.bf16.mxu0 %v1244
    %1723 = vmatpush1.bf16.msra.mxu0 %v1243
    %1724 = vmatprep.subr.bf16.mxu0 %v1248
    %1725 = vmatpush1.bf16.msra.mxu0 %v1247
    %1726 = vmatprep.subr.bf16.mxu0 %v1252
    %1727 = vmatpush1.bf16.msra.mxu0 %v1251
    %1728 = vmatprep.subr.bf16.mxu0 %v1256
    %1729 = vmatpush1.bf16.msra.mxu0 %v1255
    %1730 = vmatprep.subr.bf16.mxu0 %v1260
    %1731 = vmatpush1.bf16.msra.mxu0 %v1259
    %1732 = vmatprep.subr.bf16.mxu0 %v1264
    %1733 = vmatpush1.bf16.msra.mxu0 %v1263
    %1734 = vmatprep.subr.bf16.mxu0 %v1268
    %1735 = vmatpush1.bf16.msra.mxu0 %v1267
    %1736 = vmatprep.subr.bf16.mxu0 %v1272
    %1737 = vmatpush1.bf16.msra.mxu0 %v1271
    %1738 = vmatprep.subr.bf16.mxu0 %v1276
    %1739 = vmatpush1.bf16.msra.mxu0 %v1275
    %1740 = vmatprep.subr.bf16.mxu0 %v1280
    %1741 = vmatpush1.bf16.msra.mxu0 %v1279
    %1742 = vmatprep.subr.bf16.mxu0 %v1284
    %1743 = vmatpush1.bf16.msra.mxu0 %v1283
    %1744 = vmatprep.mubr.bf16.mxu0 %v378
    %1745 = vmatmul.mubr.bf16.gmra.mrb[0].mxu0 %v377
    %v1746 = vpop.f32.mrb[0].mxu0
    %v1747 = vadd.f32 %v1706, %v1746
    %v1748 = vpop.f32.mrb[0].mxu0
    %v1749 = vadd.f32 %v1708, %v1748
    %v1750 = vpop.f32.mrb[0].mxu0
    %v1751 = vpop.f32.mrb[0].mxu0
    %1752 = vdwg.mxu0
    %1753 = vmatprep.subr.bf16.mxu0 %v1288
    %1754 = vmatpush1.bf16.msra.mxu0 %v1287
    %1755 = vmatprep.subr.bf16.mxu0 %v1292
    %1756 = vmatpush1.bf16.msra.mxu0 %v1291
    %1757 = vmatprep.subr.bf16.mxu0 %v1296
    %1758 = vmatpush1.bf16.msra.mxu0 %v1295
    %1759 = vmatprep.subr.bf16.mxu0 %v1300
    %1760 = vmatpush1.bf16.msra.mxu0 %v1299
    %1761 = vmatprep.subr.bf16.mxu0 %v1304
    %1762 = vmatpush1.bf16.msra.mxu0 %v1303
    %1763 = vmatprep.subr.bf16.mxu0 %v1308
    %1764 = vmatpush1.bf16.msra.mxu0 %v1307
    %1765 = vmatprep.subr.bf16.mxu0 %v1312
    %1766 = vmatpush1.bf16.msra.mxu0 %v1311
    %1767 = vmatprep.subr.bf16.mxu0 %v1316
    %1768 = vmatpush1.bf16.msra.mxu0 %v1315
    %1769 = vmatprep.subr.bf16.mxu0 %v1320
    %1770 = vmatpush1.bf16.msra.mxu0 %v1319
    %1771 = vmatprep.subr.bf16.mxu0 %v1324
    %1772 = vmatpush1.bf16.msra.mxu0 %v1323
    %1773 = vmatprep.subr.bf16.mxu0 %v1328
    %1774 = vmatpush1.bf16.msra.mxu0 %v1327
    %1775 = vmatprep.subr.bf16.mxu0 %v1332
    %1776 = vmatpush1.bf16.msra.mxu0 %v1331
    %1777 = vmatprep.subr.bf16.mxu0 %v1336
    %1778 = vmatpush1.bf16.msra.mxu0 %v1335
    %1779 = vmatprep.subr.bf16.mxu0 %v1340
    %1780 = vmatpush1.bf16.msra.mxu0 %v1339
    %1781 = vmatprep.subr.bf16.mxu0 %v1344
    %1782 = vmatpush1.bf16.msra.mxu0 %v1343
    %1783 = vmatprep.subr.bf16.mxu0 %v1348
    %1784 = vmatpush1.bf16.msra.mxu0 %v1347
    %1785 = vmatprep.mubr.bf16.mxu0 %v380
    %1786 = vmatmul.mubr.bf16.gmra.mrb[0].mxu0 %v379
    %v1787 = vpop.f32.mrb[0].mxu0
    %v1788 = vadd.f32 %v1747, %v1787
    %v1789 = vpop.f32.mrb[0].mxu0
    %v1790 = vadd.f32 %v1749, %v1789
    %v1791 = vpop.f32.mrb[0].mxu0
    %v1792 = vpop.f32.mrb[0].mxu0
    %1793 = vdwg.mxu0
    %1794 = vmatprep.subr.bf16.mxu0 %v1352
    %1795 = vmatpush1.bf16.msra.mxu0 %v1351
    %1796 = vmatprep.subr.bf16.mxu0 %v1356
    %1797 = vmatpush1.bf16.msra.mxu0 %v1355
    %1798 = vmatprep.subr.bf16.mxu0 %v1360
    %1799 = vmatpush1.bf16.msra.mxu0 %v1359
    %1800 = vmatprep.subr.bf16.mxu0 %v1364
    %1801 = vmatpush1.bf16.msra.mxu0 %v1363
    %1802 = vmatprep.subr.bf16.mxu0 %v1368
    %1803 = vmatpush1.bf16.msra.mxu0 %v1367
    %1804 = vmatprep.subr.bf16.mxu0 %v1372
    %1805 = vmatpush1.bf16.msra.mxu0 %v1371
    %1806 = vmatprep.subr.bf16.mxu0 %v1376
    %1807 = vmatpush1.bf16.msra.mxu0 %v1375
    %1808 = vmatprep.subr.bf16.mxu0 %v1380
    %1809 = vmatpush1.bf16.msra.mxu0 %v1379
    %1810 = vmatprep.subr.bf16.mxu0 %v1384
    %1811 = vmatpush1.bf16.msra.mxu0 %v1383
    %1812 = vmatprep.subr.bf16.mxu0 %v1388
    %1813 = vmatpush1.bf16.msra.mxu0 %v1387
    %1814 = vmatprep.subr.bf16.mxu0 %v1392
    %1815 = vmatpush1.bf16.msra.mxu0 %v1391
    %1816 = vmatprep.subr.bf16.mxu0 %v1396
    %1817 = vmatpush1.bf16.msra.mxu0 %v1395
    %1818 = vmatprep.subr.bf16.mxu0 %v1400
    %1819 = vmatpush1.bf16.msra.mxu0 %v1399
    %1820 = vmatprep.subr.bf16.mxu0 %v1404
    %1821 = vmatpush1.bf16.msra.mxu0 %v1403
    %1822 = vmatprep.subr.bf16.mxu0 %v1408
    %1823 = vmatpush1.bf16.msra.mxu0 %v1407
    %1824 = vmatprep.subr.bf16.mxu0 %v1412
    %1825 = vmatpush1.bf16.msra.mxu0 %v1411
    %1826 = vmatprep.mubr.bf16.mxu0 %v382
    %1827 = vmatmul.mubr.bf16.gmra.mrb[0].mxu0 %v381
    %v1828 = vpop.f32.mrb[0].mxu0
    %v1829 = vadd.f32 %v1788, %v1828
    %v1830 = vpop.f32.mrb[0].mxu0
    %v1831 = vadd.f32 %v1790, %v1830
    %v1832 = vpop.f32.mrb[0].mxu0
    %v1833 = vpop.f32.mrb[0].mxu0
    %1834 = vdwg.mxu0
    %1835 = vmatprep.subr.bf16.mxu0 %v1162
    %1836 = vmatpush1.bf16.msra.mxu0 %v1161
    %1837 = vmatprep.subr.bf16.mxu0 %v1166
    %1838 = vmatpush1.bf16.msra.mxu0 %v1165
    %1839 = vmatprep.subr.bf16.mxu0 %v1170
    %1840 = vmatpush1.bf16.msra.mxu0 %v1169
    %1841 = vmatprep.subr.bf16.mxu0 %v1174
    %1842 = vmatpush1.bf16.msra.mxu0 %v1173
    %1843 = vmatprep.subr.bf16.mxu0 %v1178
    %1844 = vmatpush1.bf16.msra.mxu0 %v1177
    %1845 = vmatprep.subr.bf16.mxu0 %v1182
    %1846 = vmatpush1.bf16.msra.mxu0 %v1181
    %1847 = vmatprep.subr.bf16.mxu0 %v1186
    %1848 = vmatpush1.bf16.msra.mxu0 %v1185
    %1849 = vmatprep.subr.bf16.mxu0 %v1190
    %1850 = vmatpush1.bf16.msra.mxu0 %v1189
    %1851 = vmatprep.subr.bf16.mxu0 %v1194
    %1852 = vmatpush1.bf16.msra.mxu0 %v1193
    %1853 = vmatprep.subr.bf16.mxu0 %v1198
    %1854 = vmatpush1.bf16.msra.mxu0 %v1197
    %1855 = vmatprep.subr.bf16.mxu0 %v1202
    %1856 = vmatpush1.bf16.msra.mxu0 %v1201
    %1857 = vmatprep.subr.bf16.mxu0 %v1206
    %1858 = vmatpush1.bf16.msra.mxu0 %v1205
    %1859 = vmatprep.subr.bf16.mxu0 %v1210
    %1860 = vmatpush1.bf16.msra.mxu0 %v1209
    %1861 = vmatprep.subr.bf16.mxu0 %v1214
    %1862 = vmatpush1.bf16.msra.mxu0 %v1213
    %1863 = vmatprep.subr.bf16.mxu0 %v1218
    %1864 = vmatpush1.bf16.msra.mxu0 %v1217
    %1865 = vmatprep.subr.bf16.mxu0 %v1222
    %1866 = vmatpush1.bf16.msra.mxu0 %v1221
    %1867 = vmatprep.mubr.bf16.mxu0 %v376
    %1868 = vmatmul.mubr.bf16.gmra.mrb[0].mxu0 %v375
    %v1869 = vpop.f32.mrb[0].mxu0
    %v1870 = vadd.f32 %v354, %v1869
    %v1871 = vpop.f32.mrb[0].mxu0
    %v1872 = vadd.f32 %v358, %v1871
    %v1873 = vpop.f32.mrb[0].mxu0
    %v1874 = vpop.f32.mrb[0].mxu0
    %1875 = vdwg.mxu0
    %1876 = vmatprep.subr.bf16.mxu0 %v1226
    %1877 = vmatpush1.bf16.msra.mxu0 %v1225
    %1878 = vmatprep.subr.bf16.mxu0 %v1230
    %1879 = vmatpush1.bf16.msra.mxu0 %v1229
    %1880 = vmatprep.subr.bf16.mxu0 %v1234
    %1881 = vmatpush1.bf16.msra.mxu0 %v1233
    %1882 = vmatprep.subr.bf16.mxu0 %v1238
    %1883 = vmatpush1.bf16.msra.mxu0 %v1237
    %1884 = vmatprep.subr.bf16.mxu0 %v1242
    %1885 = vmatpush1.bf16.msra.mxu0 %v1241
    %1886 = vmatprep.subr.bf16.mxu0 %v1246
    %1887 = vmatpush1.bf16.msra.mxu0 %v1245
    %1888 = vmatprep.subr.bf16.mxu0 %v1250
    %1889 = vmatpush1.bf16.msra.mxu0 %v1249
    %1890 = vmatprep.subr.bf16.mxu0 %v1254
    %1891 = vmatpush1.bf16.msra.mxu0 %v1253
    %1892 = vmatprep.subr.bf16.mxu0 %v1258
    %1893 = vmatpush1.bf16.msra.mxu0 %v1257
    %1894 = vmatprep.subr.bf16.mxu0 %v1262
    %1895 = vmatpush1.bf16.msra.mxu0 %v1261
    %1896 = vmatprep.subr.bf16.mxu0 %v1266
    %1897 = vmatpush1.bf16.msra.mxu0 %v1265
    %1898 = vmatprep.subr.bf16.mxu0 %v1270
    %1899 = vmatpush1.bf16.msra.mxu0 %v1269
    %1900 = vmatprep.subr.bf16.mxu0 %v1274
    %1901 = vmatpush1.bf16.msra.mxu0 %v1273
    %1902 = vmatprep.subr.bf16.mxu0 %v1278
    %1903 = vmatpush1.bf16.msra.mxu0 %v1277
    %1904 = vmatprep.subr.bf16.mxu0 %v1282
    %1905 = vmatpush1.bf16.msra.mxu0 %v1281
    %1906 = vmatprep.subr.bf16.mxu0 %v1286
    %1907 = vmatpush1.bf16.msra.mxu0 %v1285
    %1908 = vmatprep.mubr.bf16.mxu0 %v378
    %1909 = vmatmul.mubr.bf16.gmra.mrb[0].mxu0 %v377
    %v1910 = vpop.f32.mrb[0].mxu0
    %v1911 = vadd.f32 %v1870, %v1910
    %v1912 = vpop.f32.mrb[0].mxu0
    %v1913 = vadd.f32 %v1872, %v1912
    %v1914 = vpop.f32.mrb[0].mxu0
    %v1915 = vpop.f32.mrb[0].mxu0
    %1916 = vdwg.mxu0
    %1917 = vmatprep.subr.bf16.mxu0 %v1290
    %1918 = vmatpush1.bf16.msra.mxu0 %v1289
    %1919 = vmatprep.subr.bf16.mxu0 %v1294
    %1920 = vmatpush1.bf16.msra.mxu0 %v1293
    %1921 = vmatprep.subr.bf16.mxu0 %v1298
    %1922 = vmatpush1.bf16.msra.mxu0 %v1297
    %1923 = vmatprep.subr.bf16.mxu0 %v1302
    %1924 = vmatpush1.bf16.msra.mxu0 %v1301
    %1925 = vmatprep.subr.bf16.mxu0 %v1306
    %1926 = vmatpush1.bf16.msra.mxu0 %v1305
    %1927 = vmatprep.subr.bf16.mxu0 %v1310
    %1928 = vmatpush1.bf16.msra.mxu0 %v1309
    %1929 = vmatprep.subr.bf16.mxu0 %v1314
    %1930 = vmatpush1.bf16.msra.mxu0 %v1313
    %1931 = vmatprep.subr.bf16.mxu0 %v1318
    %1932 = vmatpush1.bf16.msra.mxu0 %v1317
    %1933 = vmatprep.subr.bf16.mxu0 %v1322
    %1934 = vmatpush1.bf16.msra.mxu0 %v1321
    %1935 = vmatprep.subr.bf16.mxu0 %v1326
    %1936 = vmatpush1.bf16.msra.mxu0 %v1325
    %1937 = vmatprep.subr.bf16.mxu0 %v1330
    %1938 = vmatpush1.bf16.msra.mxu0 %v1329
    %1939 = vmatprep.subr.bf16.mxu0 %v1334
    %1940 = vmatpush1.bf16.msra.mxu0 %v1333
    %1941 = vmatprep.subr.bf16.mxu0 %v1338
    %1942 = vmatpush1.bf16.msra.mxu0 %v1337
    %1943 = vmatprep.subr.bf16.mxu0 %v1342
    %1944 = vmatpush1.bf16.msra.mxu0 %v1341
    %1945 = vmatprep.subr.bf16.mxu0 %v1346
    %1946 = vmatpush1.bf16.msra.mxu0 %v1345
    %1947 = vmatprep.subr.bf16.mxu0 %v1350
    %1948 = vmatpush1.bf16.msra.mxu0 %v1349
    %1949 = vmatprep.mubr.bf16.mxu0 %v380
    %1950 = vmatmul.mubr.bf16.gmra.mrb[0].mxu0 %v379
    %v1951 = vpop.f32.mrb[0].mxu0
    %v1952 = vadd.f32 %v1911, %v1951
    %v1953 = vpop.f32.mrb[0].mxu0
    %v1954 = vadd.f32 %v1913, %v1953
    %v1955 = vpop.f32.mrb[0].mxu0
    %v1956 = vpop.f32.mrb[0].mxu0
    %1957 = vdwg.mxu0
    %1958 = vmatprep.subr.bf16.mxu0 %v1354
    %1959 = vmatpush1.bf16.msra.mxu0 %v1353
    %1960 = vmatprep.subr.bf16.mxu0 %v1358
    %1961 = vmatpush1.bf16.msra.mxu0 %v1357
    %1962 = vmatprep.subr.bf16.mxu0 %v1362
    %1963 = vmatpush1.bf16.msra.mxu0 %v1361
    %1964 = vmatprep.subr.bf16.mxu0 %v1366
    %1965 = vmatpush1.bf16.msra.mxu0 %v1365
    %1966 = vmatprep.subr.bf16.mxu0 %v1370
    %1967 = vmatpush1.bf16.msra.mxu0 %v1369
    %1968 = vmatprep.subr.bf16.mxu0 %v1374
    %1969 = vmatpush1.bf16.msra.mxu0 %v1373
    %1970 = vmatprep.subr.bf16.mxu0 %v1378
    %1971 = vmatpush1.bf16.msra.mxu0 %v1377
    %1972 = vmatprep.subr.bf16.mxu0 %v1382
    %1973 = vmatpush1.bf16.msra.mxu0 %v1381
    %1974 = vmatprep.subr.bf16.mxu0 %v1386
    %1975 = vmatpush1.bf16.msra.mxu0 %v1385
    %1976 = vmatprep.subr.bf16.mxu0 %v1390
    %1977 = vmatpush1.bf16.msra.mxu0 %v1389
    %1978 = vmatprep.subr.bf16.mxu0 %v1394
    %1979 = vmatpush1.bf16.msra.mxu0 %v1393
    %1980 = vmatprep.subr.bf16.mxu0 %v1398
    %1981 = vmatpush1.bf16.msra.mxu0 %v1397
    %1982 = vmatprep.subr.bf16.mxu0 %v1402
    %1983 = vmatpush1.bf16.msra.mxu0 %v1401
    %1984 = vmatprep.subr.bf16.mxu0 %v1406
    %1985 = vmatpush1.bf16.msra.mxu0 %v1405
    %1986 = vmatprep.subr.bf16.mxu0 %v1410
    %1987 = vmatpush1.bf16.msra.mxu0 %v1409
    %1988 = vmatprep.subr.bf16.mxu0 %v1414
    %1989 = vmatpush1.bf16.msra.mxu0 %v1413
    %1990 = vmatprep.mubr.bf16.mxu0 %v382
    %1991 = vmatmul.mubr.bf16.gmra.mrb[0].mxu0 %v381
    %v1992 = vpop.f32.mrb[0].mxu0
    %v1993 = vadd.f32 %v1952, %v1992
    %v1994 = vpop.f32.mrb[0].mxu0
    %v1995 = vadd.f32 %v1954, %v1994
    %v1996 = vpop.f32.mrb[0].mxu0
    %v1997 = vpop.f32.mrb[0].mxu0
    %1998 = vdwg.mxu0
    %v1999 = vtanh.pop %v1829
    %v2000 = vtanh.pop %v1831
    %v2001 = vtanh.pop %v1993
    %v2002 = vtanh.pop %v1995
    %v2003 = vpack.c.bf16 %v1999, %v1999
    %v2004 = vpack.c.bf16 %v2000, %v2000
    %v2005 = vpack.c.bf16 %v2001, %v2001
    %v2006 = vpack.c.bf16 %v2002, %v2002
    %v2007 = vld [vmem:[#allocation7] sm:$0xf]
    %v2008 = vld [vmem:[#allocation7 + $0x4] sm:$0xf]
    %v2009 = vld [vmem:[#allocation7 + $0x8] sm:$0xf]
    %v2010 = vld [vmem:[#allocation7 + $0xc] sm:$0xf]
    %v2011 = vld [vmem:[#allocation7 + $0x10] sm:$0xf]
    %v2012 = vld [vmem:[#allocation7 + $0x14] sm:$0xf]
    %v2013 = vld [vmem:[#allocation7 + $0x18] sm:$0xf]
    %v2014 = vld [vmem:[#allocation7 + $0x1c] sm:$0xf]
    %v2015 = vld [vmem:[#allocation7 + $0x20] sm:$0xf]
    %v2016 = vld [vmem:[#allocation7 + $0x24] sm:$0xf]
    %v2017 = vld [vmem:[#allocation7 + $0x28] sm:$0xf]
    %v2018 = vld [vmem:[#allocation7 + $0x2c] sm:$0xf]
    %v2019 = vld [vmem:[#allocation7 + $0x30] sm:$0xf]
    %v2020 = vld [vmem:[#allocation7 + $0x34] sm:$0xf]
    %v2021 = vld [vmem:[#allocation7 + $0x38] sm:$0xf]
    %v2022 = vld [vmem:[#allocation7 + $0x3c] sm:$0xf]
    %v2023 = vld [vmem:[#allocation7 + $0x40] sm:$0xf]
    %v2024 = vld [vmem:[#allocation7 + $0x44] sm:$0xf]
    %v2025 = vld [vmem:[#allocation7 + $0x48] sm:$0xf]
    %v2026 = vld [vmem:[#allocation7 + $0x4c] sm:$0xf]
    %v2027 = vld [vmem:[#allocation7 + $0x50] sm:$0xf]
    %v2028 = vld [vmem:[#allocation7 + $0x54] sm:$0xf]
    %v2029 = vld [vmem:[#allocation7 + $0x58] sm:$0xf]
    %v2030 = vld [vmem:[#allocation7 + $0x5c] sm:$0xf]
    %v2031 = vld [vmem:[#allocation7 + $0x60] sm:$0xf]
    %v2032 = vld [vmem:[#allocation7 + $0x64] sm:$0xf]
    %v2033 = vld [vmem:[#allocation7 + $0x68] sm:$0xf]
    %v2034 = vld [vmem:[#allocation7 + $0x6c] sm:$0xf]
    %v2035 = vld [vmem:[#allocation7 + $0x70] sm:$0xf]
    %v2036 = vld [vmem:[#allocation7 + $0x74] sm:$0xf]
    %v2037 = vld [vmem:[#allocation7 + $0x78] sm:$0xf]
    %v2038 = vld [vmem:[#allocation7 + $0x7c] sm:$0xf]
    %v2039 = vld [vmem:[#allocation7 + $0x80] sm:$0xf]
    %v2040 = vld [vmem:[#allocation7 + $0x84] sm:$0xf]
    %v2041 = vld [vmem:[#allocation7 + $0x88] sm:$0xf]
    %v2042 = vld [vmem:[#allocation7 + $0x8c] sm:$0xf]
    %v2043 = vld [vmem:[#allocation7 + $0x90] sm:$0xf]
    %v2044 = vld [vmem:[#allocation7 + $0x94] sm:$0xf]
    %v2045 = vld [vmem:[#allocation7 + $0x98] sm:$0xf]
    %v2046 = vld [vmem:[#allocation7 + $0x9c] sm:$0xf]
    %v2047 = vld [vmem:[#allocation7 + $0xa0] sm:$0xf]
    %v2048 = vld [vmem:[#allocation7 + $0xa4] sm:$0xf]
    %v2049 = vld [vmem:[#allocation7 + $0xa8] sm:$0xf]
    %v2050 = vld [vmem:[#allocation7 + $0xac] sm:$0xf]
    %v2051 = vld [vmem:[#allocation7 + $0xb0] sm:$0xf]
    %v2052 = vld [vmem:[#allocation7 + $0xb4] sm:$0xf]
    %v2053 = vld [vmem:[#allocation7 + $0xb8] sm:$0xf]
    %v2054 = vld [vmem:[#allocation7 + $0xbc] sm:$0xf]
    %v2055 = vld [vmem:[#allocation7 + $0xc0] sm:$0xf]
    %v2056 = vld [vmem:[#allocation7 + $0xc4] sm:$0xf]
    %v2057 = vld [vmem:[#allocation7 + $0xc8] sm:$0xf]
    %v2058 = vld [vmem:[#allocation7 + $0xcc] sm:$0xf]
    %v2059 = vld [vmem:[#allocation7 + $0xd0] sm:$0xf]
    %v2060 = vld [vmem:[#allocation7 + $0xd4] sm:$0xf]
    %v2061 = vld [vmem:[#allocation7 + $0xd8] sm:$0xf]
    %v2062 = vld [vmem:[#allocation7 + $0xdc] sm:$0xf]
    %v2063 = vld [vmem:[#allocation7 + $0xe0] sm:$0xf]
    %v2064 = vld [vmem:[#allocation7 + $0xe4] sm:$0xf]
    %v2065 = vld [vmem:[#allocation7 + $0xe8] sm:$0xf]
    %v2066 = vld [vmem:[#allocation7 + $0xec] sm:$0xf]
    %v2067 = vld [vmem:[#allocation7 + $0xf0] sm:$0xf]
    %v2068 = vld [vmem:[#allocation7 + $0xf4] sm:$0xf]
    %v2069 = vld [vmem:[#allocation7 + $0xf8] sm:$0xf]
    %v2070 = vld [vmem:[#allocation7 + $0xfc] sm:$0xf]
    %v2071 = vld [vmem:[%s4] sm:$0x1]
    %v2073 = vlaneseq
    %v2074 = vshrl.u32 %v2073, 7
    %v2075 = vsub.s32 0, %v2074
    %v2076 = vrot.slane %v2071, %v2075
    %v2142 = vunpack.c.l.b16 %v2007
    %v2143 = vunpack.c.l.b16 %v2008
    %v2144 = vunpack.c.l.b16 %v2009
    %v2145 = vunpack.c.l.b16 %v2010
    %v2146 = vunpack.c.l.b16 %v2011
    %v2147 = vunpack.c.l.b16 %v2012
    %v2148 = vunpack.c.l.b16 %v2013
    %v2149 = vunpack.c.l.b16 %v2014
    %v2150 = vunpack.c.l.b16 %v2015
    %v2151 = vunpack.c.l.b16 %v2016
    %v2152 = vunpack.c.l.b16 %v2017
    %v2153 = vunpack.c.l.b16 %v2018
    %v2154 = vunpack.c.l.b16 %v2019
    %v2155 = vunpack.c.l.b16 %v2020
    %v2156 = vunpack.c.l.b16 %v2021
    %v2157 = vunpack.c.l.b16 %v2022
    %v2158 = vunpack.c.l.b16 %v2023
    %v2159 = vunpack.c.l.b16 %v2024
    %v2160 = vunpack.c.l.b16 %v2025
    %v2161 = vunpack.c.l.b16 %v2026
    %v2162 = vunpack.c.l.b16 %v2027
    %v2163 = vunpack.c.l.b16 %v2028
    %v2164 = vunpack.c.l.b16 %v2029
    %v2165 = vunpack.c.l.b16 %v2030
    %v2166 = vunpack.c.l.b16 %v2031
    %v2167 = vunpack.c.l.b16 %v2032
    %v2168 = vunpack.c.l.b16 %v2033
    %v2169 = vunpack.c.l.b16 %v2034
    %v2170 = vunpack.c.l.b16 %v2035
    %v2171 = vunpack.c.l.b16 %v2036
    %v2172 = vunpack.c.l.b16 %v2037
    %v2173 = vunpack.c.l.b16 %v2038
    %v2174 = vunpack.c.l.b16 %v2039
    %v2175 = vunpack.c.l.b16 %v2040
    %v2176 = vunpack.c.l.b16 %v2041
    %v2177 = vunpack.c.l.b16 %v2042
    %v2178 = vunpack.c.l.b16 %v2043
    %v2179 = vunpack.c.l.b16 %v2044
    %v2180 = vunpack.c.l.b16 %v2045
    %v2181 = vunpack.c.l.b16 %v2046
    %v2182 = vunpack.c.l.b16 %v2047
    %v2183 = vunpack.c.l.b16 %v2048
    %v2184 = vunpack.c.l.b16 %v2049
    %v2185 = vunpack.c.l.b16 %v2050
    %v2186 = vunpack.c.l.b16 %v2051
    %v2187 = vunpack.c.l.b16 %v2052
    %v2188 = vunpack.c.l.b16 %v2053
    %v2189 = vunpack.c.l.b16 %v2054
    %v2190 = vunpack.c.l.b16 %v2055
    %v2191 = vunpack.c.l.b16 %v2056
    %v2192 = vunpack.c.l.b16 %v2057
    %v2193 = vunpack.c.l.b16 %v2058
    %v2194 = vunpack.c.l.b16 %v2059
    %v2195 = vunpack.c.l.b16 %v2060
    %v2196 = vunpack.c.l.b16 %v2061
    %v2197 = vunpack.c.l.b16 %v2062
    %v2198 = vunpack.c.l.b16 %v2063
    %v2199 = vunpack.c.l.b16 %v2064
    %v2200 = vunpack.c.l.b16 %v2065
    %v2201 = vunpack.c.l.b16 %v2066
    %v2202 = vunpack.c.l.b16 %v2067
    %v2203 = vunpack.c.l.b16 %v2068
    %v2204 = vunpack.c.l.b16 %v2069
    %v2205 = vunpack.c.l.b16 %v2070
    %v2206 = vpack.c.b16 %v2143, %v2142
    %v2207 = vpack.c.b16 %v2145, %v2144
    %v2208 = vpack.c.b16 %v2147, %v2146
    %v2209 = vpack.c.b16 %v2149, %v2148
    %v2210 = vpack.c.b16 %v2151, %v2150
    %v2211 = vpack.c.b16 %v2153, %v2152
    %v2212 = vpack.c.b16 %v2155, %v2154
    %v2213 = vpack.c.b16 %v2157, %v2156
    %v2214 = vpack.c.b16 %v2159, %v2158
    %v2215 = vpack.c.b16 %v2161, %v2160
    %v2216 = vpack.c.b16 %v2163, %v2162
    %v2217 = vpack.c.b16 %v2165, %v2164
    %v2218 = vpack.c.b16 %v2167, %v2166
    %v2219 = vpack.c.b16 %v2169, %v2168
    %v2220 = vpack.c.b16 %v2171, %v2170
    %v2221 = vpack.c.b16 %v2173, %v2172
    %v2222 = vpack.c.b16 %v2175, %v2174
    %v2223 = vpack.c.b16 %v2177, %v2176
    %v2224 = vpack.c.b16 %v2179, %v2178
    %v2225 = vpack.c.b16 %v2181, %v2180
    %v2226 = vpack.c.b16 %v2183, %v2182
    %v2227 = vpack.c.b16 %v2185, %v2184
    %v2228 = vpack.c.b16 %v2187, %v2186
    %v2229 = vpack.c.b16 %v2189, %v2188
    %v2230 = vpack.c.b16 %v2191, %v2190
    %v2231 = vpack.c.b16 %v2193, %v2192
    %v2232 = vpack.c.b16 %v2195, %v2194
    %v2233 = vpack.c.b16 %v2197, %v2196
    %v2234 = vpack.c.b16 %v2199, %v2198
    %v2235 = vpack.c.b16 %v2201, %v2200
    %v2236 = vpack.c.b16 %v2203, %v2202
    %v2237 = vpack.c.b16 %v2205, %v2204
    %2270 = vmatprep.subr.bf16.mxu0 0
    %2271 = vmatpush1.bf16.msra.mxu0 %v2206
    %2272 = vmatprep.subr.bf16.mxu0 0
    %2273 = vmatpush1.bf16.msra.mxu0 %v2207
    %2274 = vmatprep.subr.bf16.mxu0 0
    %2275 = vmatpush1.bf16.msra.mxu0 %v2208
    %2276 = vmatprep.subr.bf16.mxu0 0
    %2277 = vmatpush1.bf16.msra.mxu0 %v2209
    %2278 = vmatprep.subr.bf16.mxu0 0
    %2279 = vmatpush1.bf16.msra.mxu0 %v2210
    %2280 = vmatprep.subr.bf16.mxu0 0
    %2281 = vmatpush1.bf16.msra.mxu0 %v2211
    %2282 = vmatprep.subr.bf16.mxu0 0
    %2283 = vmatpush1.bf16.msra.mxu0 %v2212
    %2284 = vmatprep.subr.bf16.mxu0 0
    %2285 = vmatpush1.bf16.msra.mxu0 %v2213
    %2286 = vmatprep.subr.bf16.mxu0 0
    %2287 = vmatpush1.bf16.msra.mxu0 %v2214
    %2288 = vmatprep.subr.bf16.mxu0 0
    %2289 = vmatpush1.bf16.msra.mxu0 %v2215
    %2290 = vmatprep.subr.bf16.mxu0 0
    %2291 = vmatpush1.bf16.msra.mxu0 %v2216
    %2292 = vmatprep.subr.bf16.mxu0 0
    %2293 = vmatpush1.bf16.msra.mxu0 %v2217
    %2294 = vmatprep.subr.bf16.mxu0 0
    %2295 = vmatpush1.bf16.msra.mxu0 %v2218
    %2296 = vmatprep.subr.bf16.mxu0 0
    %2297 = vmatpush1.bf16.msra.mxu0 %v2219
    %2298 = vmatprep.subr.bf16.mxu0 0
    %2299 = vmatpush1.bf16.msra.mxu0 %v2220
    %2300 = vmatprep.subr.bf16.mxu0 0
    %2301 = vmatpush1.bf16.msra.mxu0 %v2221
    %2302 = vmatprep.mubr.bf16.mxu0 %v2004
    %2303 = vmatmul.mubr.bf16.gmra.mrb[0].mxu0 %v2003
    %v2304 = vpop.f32.mrb[0].mxu0
    %v2305 = vadd.f32 %v2076, %v2304
    %v2306 = vpop.f32.mrb[0].mxu0
    %v2307 = vpop.f32.mrb[0].mxu0
    %v2308 = vpop.f32.mrb[0].mxu0
    %2309 = vdwg.mxu0
    %2310 = vmatprep.subr.bf16.mxu0 0
    %2311 = vmatpush1.bf16.msra.mxu0 %v2222
    %2312 = vmatprep.subr.bf16.mxu0 0
    %2313 = vmatpush1.bf16.msra.mxu0 %v2223
    %2314 = vmatprep.subr.bf16.mxu0 0
    %2315 = vmatpush1.bf16.msra.mxu0 %v2224
    %2316 = vmatprep.subr.bf16.mxu0 0
    %2317 = vmatpush1.bf16.msra.mxu0 %v2225
    %2318 = vmatprep.subr.bf16.mxu0 0
    %2319 = vmatpush1.bf16.msra.mxu0 %v2226
    %2320 = vmatprep.subr.bf16.mxu0 0
    %2321 = vmatpush1.bf16.msra.mxu0 %v2227
    %2322 = vmatprep.subr.bf16.mxu0 0
    %2323 = vmatpush1.bf16.msra.mxu0 %v2228
    %2324 = vmatprep.subr.bf16.mxu0 0
    %2325 = vmatpush1.bf16.msra.mxu0 %v2229
    %2326 = vmatprep.subr.bf16.mxu0 0
    %2327 = vmatpush1.bf16.msra.mxu0 %v2230
    %2328 = vmatprep.subr.bf16.mxu0 0
    %2329 = vmatpush1.bf16.msra.mxu0 %v2231
    %2330 = vmatprep.subr.bf16.mxu0 0
    %2331 = vmatpush1.bf16.msra.mxu0 %v2232
    %2332 = vmatprep.subr.bf16.mxu0 0
    %2333 = vmatpush1.bf16.msra.mxu0 %v2233
    %2334 = vmatprep.subr.bf16.mxu0 0
    %2335 = vmatpush1.bf16.msra.mxu0 %v2234
    %2336 = vmatprep.subr.bf16.mxu0 0
    %2337 = vmatpush1.bf16.msra.mxu0 %v2235
    %2338 = vmatprep.subr.bf16.mxu0 0
    %2339 = vmatpush1.bf16.msra.mxu0 %v2236
    %2340 = vmatprep.subr.bf16.mxu0 0
    %2341 = vmatpush1.bf16.msra.mxu0 %v2237
    %2342 = vmatprep.mubr.bf16.mxu0 %v2006
    %2343 = vmatmul.mubr.bf16.gmra.mrb[0].mxu0 %v2005
    %v2344 = vpop.f32.mrb[0].mxu0
    %v2345 = vadd.f32 %v2305, %v2344
    %v2346 = vpop.f32.mrb[0].mxu0
    %v2347 = vpop.f32.mrb[0].mxu0
    %v2348 = vpop.f32.mrb[0].mxu0
    %2349 = vdwg.mxu0
    %v2350 = vtanh.pop %v2345
    %v2351 = vpack.c.bf16 %v2350, %v2350
    %v2352 = vld [vmem:[#allocation8] sm:$0xf]
    %v2353 = vld [vmem:[#allocation8 + $0x4] sm:$0xf]
    %v2354 = vld [vmem:[#allocation8 + $0x8] sm:$0xf]
    %v2355 = vld [vmem:[#allocation8 + $0xc] sm:$0xf]
    %v2356 = vld [vmem:[#allocation8 + $0x10] sm:$0xf]
    %v2357 = vld [vmem:[#allocation8 + $0x14] sm:$0xf]
    %v2358 = vld [vmem:[#allocation8 + $0x18] sm:$0xf]
    %v2359 = vld [vmem:[#allocation8 + $0x1c] sm:$0xf]
    %v2360 = vld [vmem:[#allocation8 + $0x20] sm:$0xf]
    %v2361 = vld [vmem:[#allocation8 + $0x24] sm:$0xf]
    %v2362 = vld [vmem:[#allocation8 + $0x28] sm:$0xf]
    %v2363 = vld [vmem:[#allocation8 + $0x2c] sm:$0xf]
    %v2364 = vld [vmem:[#allocation8 + $0x30] sm:$0xf]
    %v2365 = vld [vmem:[#allocation8 + $0x34] sm:$0xf]
    %v2366 = vld [vmem:[#allocation8 + $0x38] sm:$0xf]
    %v2367 = vld [vmem:[#allocation8 + $0x3c] sm:$0xf]
    %v2368 = vld [vmem:[%s6] sm:$0x1]
    %v2370 = vlaneseq
    %v2371 = vshrl.u32 %v2370, 7
    %v2372 = vsub.s32 0, %v2371
    %v2373 = vrot.slane %v2368, %v2372
    %v2391 = vunpack.c.l.b16 %v2352
    %v2392 = vunpack.c.l.b16 %v2353
    %v2393 = vunpack.c.l.b16 %v2354
    %v2394 = vunpack.c.l.b16 %v2355
    %v2395 = vunpack.c.l.b16 %v2356
    %v2396 = vunpack.c.l.b16 %v2357
    %v2397 = vunpack.c.l.b16 %v2358
    %v2398 = vunpack.c.l.b16 %v2359
    %v2399 = vunpack.c.l.b16 %v2360
    %v2400 = vunpack.c.l.b16 %v2361
    %v2401 = vunpack.c.l.b16 %v2362
    %v2402 = vunpack.c.l.b16 %v2363
    %v2403 = vunpack.c.l.b16 %v2364
    %v2404 = vunpack.c.l.b16 %v2365
    %v2405 = vunpack.c.l.b16 %v2366
    %v2406 = vunpack.c.l.b16 %v2367
    %v2407 = vpack.c.b16 %v2392, %v2391
    %v2408 = vpack.c.b16 %v2394, %v2393
    %v2409 = vpack.c.b16 %v2396, %v2395
    %v2410 = vpack.c.b16 %v2398, %v2397
    %v2411 = vpack.c.b16 %v2400, %v2399
    %v2412 = vpack.c.b16 %v2402, %v2401
    %v2413 = vpack.c.b16 %v2404, %v2403
    %v2414 = vpack.c.b16 %v2406, %v2405
    %2423 = vmatprep.subr.bf16.mxu0 0
    %2424 = vmatpush1.bf16.msra.mxu0 %v2407
    %2425 = vmatprep.subr.bf16.mxu0 0
    %2426 = vmatpush1.bf16.msra.mxu0 %v2408
    %2427 = vmatprep.subr.bf16.mxu0 0
    %2428 = vmatpush1.bf16.msra.mxu0 %v2409
    %2429 = vmatprep.subr.bf16.mxu0 0
    %2430 = vmatpush1.bf16.msra.mxu0 %v2410
    %2431 = vmatprep.subr.bf16.mxu0 0
    %2432 = vmatpush1.bf16.msra.mxu0 %v2411
    %2433 = vmatprep.subr.bf16.mxu0 0
    %2434 = vmatpush1.bf16.msra.mxu0 %v2412
    %2435 = vmatprep.subr.bf16.mxu0 0
    %2436 = vmatpush1.bf16.msra.mxu0 %v2413
    %2437 = vmatprep.subr.bf16.mxu0 0
    %2438 = vmatpush1.bf16.msra.mxu0 %v2414
    %2439 = vmatprep.subr.bf16.mxu0 0
    %2440 = vmatpush1.bf16.msra.mxu0 0
    %2441 = vmatprep.subr.bf16.mxu0 0
    %2442 = vmatpush1.bf16.msra.mxu0 0
    %2443 = vmatprep.subr.bf16.mxu0 0
    %2444 = vmatpush1.bf16.msra.mxu0 0
    %2445 = vmatprep.subr.bf16.mxu0 0
    %2446 = vmatpush1.bf16.msra.mxu0 0
    %2447 = vmatprep.subr.bf16.mxu0 0
    %2448 = vmatpush1.bf16.msra.mxu0 0
    %2449 = vmatprep.subr.bf16.mxu0 0
    %2450 = vmatpush1.bf16.msra.mxu0 0
    %2451 = vmatprep.subr.bf16.mxu0 0
    %2452 = vmatpush1.bf16.msra.mxu0 0
    %2453 = vmatprep.subr.bf16.mxu0 0
    %2454 = vmatpush1.bf16.msra.mxu0 0
    %2455 = vmatprep.mubr.bf16.mxu0 0
    %2456 = vmatmul.mubr.bf16.gmra.mrb[0].mxu0 %v2351
    %v2457 = vpop.f32.mrb[0].mxu0
    %v2458 = vadd.f32 %v2373, %v2457
    %v2459 = vpop.f32.mrb[0].mxu0
    %v2460 = vpop.f32.mrb[0].mxu0
    %v2461 = vpop.f32.mrb[0].mxu0
    %2462 = vdwg.mxu0
    %v2463 = vtanh.pop %v2458
    %2464 = vst [vmem:[#allocation10] sm:$0xff] %v2463
    // Predicated region
    $region46: #{tpu_custom_call.1} parent=1 // pred_check
      _
    $region47: #{tpu_custom_call.1} parent=1 // pred_check_branch
      %2466 = sbr.rel (0) target = $region49
    $region48: #{tpu_custom_call.1} parent=1 // pred_region
      %s2468 = ssub.s32 128, 128
      %2469 = vsyncadd [#allocation4], %s2468
      %s2471 = sshll.u32 [#allocation10], 4
      %s2472 = int_to_ptr.vmem [resolvable:$true] %s2471
      %2474 = dma.vmem_to_hbm [thread:$0]  %s2472, 128, %s7, [#allocation4]
    $region49: #{tpu_custom_call.1} parent=1 // pred_fallthru
      _
    // Predicated region
    $region50: #{tpu_custom_call.1} parent=1 // pred_check
      _
    $region51: #{tpu_custom_call.1} parent=1 // pred_check_branch
      %2476 = sbr.rel (0) target = $region53
    $region52: #{tpu_custom_call.1} parent=1 // pred_region
      %2477 = dma.done [#allocation4], 128
    $region53: #{tpu_custom_call.1} parent=1 // pred_fallthru
      _
    %2478 = vsyncpa [#allocation3], 1
    %2479 = vsyncpa [#allocation6], 1
    %2480 = vsyncpa [#allocation9], 1
    %2481 = vsyncpa [#allocation4], 1

</llo_original>
